<compile_context>
chip_gen: v7x
topology: tpu7x:2x2x1
jax: 0.10.0
libtpu: 0.0.40
codegen_flags: <defaults>
</compile_context>

<pallas_src>
import functools

import jax
import jax.numpy as jnp
from jax.experimental import pallas as pl
from jax.experimental.pallas import tpu as pltpu


def _round_up(x, m):
    return (x + m - 1) // m * m


def _conv3x3_bias_relu_kernel(x_ref, w_ref, b_ref, o_ref, acc_ref, *, H, W):
    # x_ref : (1, H+2, W, 3*Cin) bf16 -- kx taps packed on the lane axis
    # w_ref : (3, 3*Cin, TCo)    bf16 -- one (3*Cin, TCo) weight slab per ky tap
    # b_ref : (1, TCo)           f32
    # o_ref : (1, H*W, TCo)      out_dtype, lane-dense (TCo % 128 == 0)
    # acc_ref:(H*W, TCo)         f32 VMEM scratch accumulator
    M = H * W
    K = x_ref.shape[-1]
    for dy in range(3):
        # Free view: slicing the H axis (not a lane/sublane axis) + a sublane-relabel
        # reshape (W is a multiple of the bf16 sublane tile for teeNet1 feature maps).
        lhs = x_ref[0, dy:dy + H, :, :].reshape(M, K)
        part = jnp.dot(lhs, w_ref[dy], preferred_element_type=jnp.float32)
        if dy == 0:
            acc_ref[...] = part           # first tap initializes (no extra zero pass)
        else:
            acc_ref[...] += part          # memory-side accumulate (MRB on v7x)
    # bias (BN folded, eval-mode identity) + ReLU; ActQuant == identity.
    o_ref[0] = jnp.maximum(acc_ref[...] + b_ref[...], 0.0).astype(o_ref.dtype)


def vgg_block_forward(x_nchw, weight, bias, *, out_dtype=jnp.float32):
    """VGGBlock.forward: quant1(relu(conv1(x))) with BN/quant as eval-mode identity.

    x_nchw: (N, Cin, H, W) f32 (PyTorch layout)
    weight: (Cout, Cin, 3, 3) f32 (MaskConv2d mask == ones)
    bias  : (Cout,) f32
    returns (N, Cout, H, W) f32
    """
    N, Cin, H, W = x_nchw.shape
    Cout = weight.shape[0]
    Cout_p = _round_up(Cout, 128)                   # lane-dense stores, fills MXU N dim
    TCo = 256 if Cout_p % 256 == 0 else 128         # Cout tile per grid step
    n_co = Cout_p // TCo
    M = H * W
    K = 3 * Cin                                     # kx packed onto the contraction axis

    # One-time boundary layout glue (NCHW -> NHWC, pad, pack kx, single bf16 cast).
    x = jnp.transpose(x_nchw, (0, 2, 3, 1))
    xpad = jnp.pad(x, ((0, 0), (1, 1), (1, 1), (0, 0)))          # (N, H+2, W+2, Cin)
    # xk[n, y, x, dx*Cin + c] = xpad[n, y, x+dx, c]
    xk = jnp.concatenate([xpad[:, :, dx:dx + W, :] for dx in range(3)], axis=-1)
    xk = xk.astype(jnp.bfloat16)                                  # (N, H+2, W, 3*Cin)

    # (Cout, Cin, ky, kx) -> (ky, kx, Cin, Cout) -> (3, 3*Cin, Cout_p) bf16 for the MXU.
    w = jnp.transpose(weight, (2, 3, 1, 0)).reshape(3, K, Cout)
    w = jnp.pad(w, ((0, 0), (0, 0), (0, Cout_p - Cout))).astype(jnp.bfloat16)
    b = jnp.pad(bias, (0, Cout_p - Cout)).reshape(1, Cout_p).astype(jnp.float32)

    kernel = functools.partial(_conv3x3_bias_relu_kernel, H=H, W=W)
    flops = 2 * N * M * 9 * Cin * Cout
    bytes_accessed = int(xk.size * 2 + w.size * 2 + b.size * 4
                         + N * M * Cout_p * jnp.dtype(out_dtype).itemsize)

    out = pl.pallas_call(
        kernel,
        out_shape=jax.ShapeDtypeStruct((N, M, Cout_p), out_dtype),
        grid=(N, n_co),
        in_specs=[
            pl.BlockSpec((1, H + 2, W, K), lambda n, co: (n, 0, 0, 0)),
            pl.BlockSpec((3, K, TCo), lambda n, co: (0, 0, co)),
            pl.BlockSpec((1, TCo), lambda n, co: (0, co)),
        ],
        out_specs=pl.BlockSpec((1, M, TCo), lambda n, co: (n, 0, co)),
        scratch_shapes=[pltpu.VMEM((M, TCo), jnp.float32)],
        compiler_params=pltpu.CompilerParams(
            dimension_semantics=("parallel", "parallel"),   # N and Cout tiles across TCs
            vmem_limit_bytes=32 * 1024 * 1024,
        ),
        cost_estimate=pl.CostEstimate(flops=flops, transcendentals=0,
                                      bytes_accessed=bytes_accessed),
    )(xk, w, b)

    out = out[:, :, :Cout].reshape(N, H, W, Cout)    # drop Cout zero-padding
    return jnp.transpose(out, (0, 3, 1, 2)).astype(jnp.float32)   # back to NCHW


if __name__ == "__main__":
    key = jax.random.PRNGKey(0)
    k_x, k_w, k_b = jax.random.split(key, 3)

    # Small shapes consistent with the first VGG block: cfg[0][0]=3 -> cfg[0][1]=64, 16x16.
    N, Cin, H, W = 2, 3, 16, 16
    Cout = 64

    x = jax.random.normal(k_x, (N, Cin, H, W), jnp.float32)
    weight = jax.random.normal(k_w, (Cout, Cin, 3, 3), jnp.float32) / jnp.sqrt(9.0 * Cin)
    bias = 0.1 * jax.random.normal(k_b, (Cout,), jnp.float32)

    out = vgg_block_forward(x, weight, bias)
    out = jax.block_until_ready(out)
    assert out.shape == (N, Cout, H, W), out.shape

    # Sanity check against an f32 XLA reference (bf16 MXU operands -> loose tolerance).
    ref = jax.lax.conv_general_dilated(
        x, weight, window_strides=(1, 1), padding="SAME",
        dimension_numbers=("NCHW", "OIHW", "NCHW"),
        precision=jax.lax.Precision.HIGHEST,
    ) + bias.reshape(1, Cout, 1, 1)
    ref = jnp.maximum(ref, 0.0)
    max_err = float(jnp.max(jnp.abs(out - ref)))
    assert max_err < 1e-1, f"max abs err {max_err}"

    print("KERNEL_OK")
</pallas_src>

<mosaic_0001>
module attributes {stable_mosaic.version = 11 : i64} {
  func.func @_conv3x3_bias_relu_kernel(%arg0: i32, %arg1: i32, %arg2: memref<1x18x16x9xbf16, #tpu.memory_space<vmem>>, %arg3: memref<3x9x128xbf16, #tpu.memory_space<vmem>>, %arg4: memref<1x128xf32, #tpu.memory_space<vmem>>, %arg5: memref<1x256x128xf32, #tpu.memory_space<vmem>>, %arg6: memref<256x128xf32, #tpu.memory_space<vmem>>) attributes {dimension_semantics = [#tpu.dimension_semantics<parallel>, #tpu.dimension_semantics<parallel>], iteration_bounds = array<i64: 2, 1>, scalar_prefetch = 0 : i64, scratch_operands = 1 : i64, tpu.core_type = #tpu.core_type<tc>, window_params = [{transform_indices = @transform_0, window_bounds = array<i64: 1, 18, 16, 9>}, {transform_indices = @transform_1, window_bounds = array<i64: 3, 9, 128>}, {transform_indices = @transform_2, window_bounds = array<i64: 1, 128>}, {transform_indices = @transform_3, window_bounds = array<i64: 1, 256, 128>}]} {
    %c0 = arith.constant 0 : index
    %c0_0 = arith.constant 0 : index
    %c0_1 = arith.constant 0 : index
    %c0_2 = arith.constant 0 : index
    %0 = vector.load %arg2[%c0, %c0_0, %c0_1, %c0_2] : memref<1x18x16x9xbf16, #tpu.memory_space<vmem>>, vector<1x16x16x9xbf16>
    %1 = vector.shape_cast %0 : vector<1x16x16x9xbf16> to vector<16x16x9xbf16>
    %2 = vector.shape_cast %1 : vector<16x16x9xbf16> to vector<256x9xbf16>
    %c0_3 = arith.constant 0 : index
    %c0_4 = arith.constant 0 : index
    %c0_5 = arith.constant 0 : index
    %3 = vector.load %arg3[%c0_3, %c0_4, %c0_5] : memref<3x9x128xbf16, #tpu.memory_space<vmem>>, vector<1x9x128xbf16>
    %4 = vector.shape_cast %3 : vector<1x9x128xbf16> to vector<9x128xbf16>
    %cst = arith.constant dense<0.000000e+00> : vector<256x128xf32>
    %5 = tpu.matmul %2, %4, %cst {dimension_numbers = #tpu.dot_dimension_numbers<[1], [0], [0], [1], [0, 0, 1, 1], [], []>} : vector<256x9xbf16>, vector<9x128xbf16>, vector<256x128xf32> -> vector<256x128xf32>
    %c0_6 = arith.constant 0 : index
    %c0_7 = arith.constant 0 : index
    %6 = vector.load %arg6[%c0_6, %c0_7] : memref<256x128xf32, #tpu.memory_space<vmem>>, vector<256x128xf32>
    tpu.vector_store %arg6[%c0_6, %c0_7], %5 {strides = array<i32>} : memref<256x128xf32, #tpu.memory_space<vmem>>, vector<256x128xf32>,
    %c0_8 = arith.constant 0 : index
    %c1 = arith.constant 1 : index
    %c0_9 = arith.constant 0 : index
    %c0_10 = arith.constant 0 : index
    %7 = vector.load %arg2[%c0_8, %c1, %c0_9, %c0_10] : memref<1x18x16x9xbf16, #tpu.memory_space<vmem>>, vector<1x16x16x9xbf16>
    %8 = vector.shape_cast %7 : vector<1x16x16x9xbf16> to vector<16x16x9xbf16>
    %9 = vector.shape_cast %8 : vector<16x16x9xbf16> to vector<256x9xbf16>
    %c1_11 = arith.constant 1 : index
    %c0_12 = arith.constant 0 : index
    %c0_13 = arith.constant 0 : index
    %10 = vector.load %arg3[%c1_11, %c0_12, %c0_13] : memref<3x9x128xbf16, #tpu.memory_space<vmem>>, vector<1x9x128xbf16>
    %11 = vector.shape_cast %10 : vector<1x9x128xbf16> to vector<9x128xbf16>
    %cst_14 = arith.constant dense<0.000000e+00> : vector<256x128xf32>
    %12 = tpu.matmul %9, %11, %cst_14 {dimension_numbers = #tpu.dot_dimension_numbers<[1], [0], [0], [1], [0, 0, 1, 1], [], []>} : vector<256x9xbf16>, vector<9x128xbf16>, vector<256x128xf32> -> vector<256x128xf32>
    %c0_15 = arith.constant 0 : index
    %c0_16 = arith.constant 0 : index
    %13 = vector.load %arg6[%c0_15, %c0_16] : memref<256x128xf32, #tpu.memory_space<vmem>>, vector<256x128xf32>
    %14 = arith.addf %13, %12 : vector<256x128xf32>
    %c0_17 = arith.constant 0 : index
    %c0_18 = arith.constant 0 : index
    %15 = vector.load %arg6[%c0_17, %c0_18] : memref<256x128xf32, #tpu.memory_space<vmem>>, vector<256x128xf32>
    tpu.vector_store %arg6[%c0_17, %c0_18], %14 {strides = array<i32>} : memref<256x128xf32, #tpu.memory_space<vmem>>, vector<256x128xf32>,
    %c0_19 = arith.constant 0 : index
    %c2 = arith.constant 2 : index
    %c0_20 = arith.constant 0 : index
    %c0_21 = arith.constant 0 : index
    %16 = vector.load %arg2[%c0_19, %c2, %c0_20, %c0_21] : memref<1x18x16x9xbf16, #tpu.memory_space<vmem>>, vector<1x16x16x9xbf16>
    %17 = vector.shape_cast %16 : vector<1x16x16x9xbf16> to vector<16x16x9xbf16>
    %18 = vector.shape_cast %17 : vector<16x16x9xbf16> to vector<256x9xbf16>
    %c2_22 = arith.constant 2 : index
    %c0_23 = arith.constant 0 : index
    %c0_24 = arith.constant 0 : index
    %19 = vector.load %arg3[%c2_22, %c0_23, %c0_24] : memref<3x9x128xbf16, #tpu.memory_space<vmem>>, vector<1x9x128xbf16>
    %20 = vector.shape_cast %19 : vector<1x9x128xbf16> to vector<9x128xbf16>
    %cst_25 = arith.constant dense<0.000000e+00> : vector<256x128xf32>
    %21 = tpu.matmul %18, %20, %cst_25 {dimension_numbers = #tpu.dot_dimension_numbers<[1], [0], [0], [1], [0, 0, 1, 1], [], []>} : vector<256x9xbf16>, vector<9x128xbf16>, vector<256x128xf32> -> vector<256x128xf32>
    %c0_26 = arith.constant 0 : index
    %c0_27 = arith.constant 0 : index
    %22 = vector.load %arg6[%c0_26, %c0_27] : memref<256x128xf32, #tpu.memory_space<vmem>>, vector<256x128xf32>
    %23 = arith.addf %22, %21 : vector<256x128xf32>
    %c0_28 = arith.constant 0 : index
    %c0_29 = arith.constant 0 : index
    %24 = vector.load %arg6[%c0_28, %c0_29] : memref<256x128xf32, #tpu.memory_space<vmem>>, vector<256x128xf32>
    tpu.vector_store %arg6[%c0_28, %c0_29], %23 {strides = array<i32>} : memref<256x128xf32, #tpu.memory_space<vmem>>, vector<256x128xf32>,
    %c0_30 = arith.constant 0 : index
    %c0_31 = arith.constant 0 : index
    %25 = vector.load %arg6[%c0_30, %c0_31] : memref<256x128xf32, #tpu.memory_space<vmem>>, vector<256x128xf32>
    %c0_32 = arith.constant 0 : index
    %c0_33 = arith.constant 0 : index
    %26 = vector.load %arg4[%c0_32, %c0_33] : memref<1x128xf32, #tpu.memory_space<vmem>>, vector<1x128xf32>
    %27 = vector.broadcast %26 : vector<1x128xf32> to vector<256x128xf32>
    %28 = arith.addf %25, %27 : vector<256x128xf32>
    %cst_34 = arith.constant 0.000000e+00 : f32
    %29 = vector.broadcast %cst_34 : f32 to vector<256x128xf32>
    %30 = arith.maximumf %28, %29 : vector<256x128xf32>
    %c0_35 = arith.constant 0 : index
    %c0_36 = arith.constant 0 : index
    %c0_37 = arith.constant 0 : index
    %31 = vector.load %arg5[%c0_35, %c0_36, %c0_37] : memref<1x256x128xf32, #tpu.memory_space<vmem>>, vector<1x256x128xf32>
    %32 = vector.shape_cast %31 : vector<1x256x128xf32> to vector<256x128xf32>
    %33 = vector.shape_cast %30 : vector<256x128xf32> to vector<1x256x128xf32>
    tpu.vector_store %arg5[%c0_35, %c0_36, %c0_37], %33 {strides = array<i32>} : memref<1x256x128xf32, #tpu.memory_space<vmem>>, vector<1x256x128xf32>,
    return
  }
  func.func @transform_0(%arg0: i32, %arg1: i32) -> (i32, i32, i32, i32) {
    %c0_i32 = arith.constant 0 : i32
    %c0_i32_0 = arith.constant 0 : i32
    %c0_i32_1 = arith.constant 0 : i32
    %c0_i32_2 = arith.constant 0 : i32
    return %arg0, %c0_i32, %c0_i32_0, %c0_i32_1 : i32, i32, i32, i32
  }
  func.func @transform_1(%arg0: i32, %arg1: i32) -> (i32, i32, i32) {
    %c0_i32 = arith.constant 0 : i32
    %c0_i32_0 = arith.constant 0 : i32
    %c0_i32_1 = arith.constant 0 : i32
    return %c0_i32, %c0_i32_0, %arg1 : i32, i32, i32
  }
  func.func @transform_2(%arg0: i32, %arg1: i32) -> (i32, i32) {
    %c0_i32 = arith.constant 0 : i32
    %c0_i32_0 = arith.constant 0 : i32
    return %c0_i32, %arg1 : i32, i32
  }
  func.func @transform_3(%arg0: i32, %arg1: i32) -> (i32, i32, i32) {
    %c0_i32 = arith.constant 0 : i32
    %c0_i32_0 = arith.constant 0 : i32
    return %arg0, %c0_i32, %arg1 : i32, i32, i32
  }
}

</mosaic_0001>

<llo_original>
// kernel: tpu_custom_call.1
$region0: #{tpu_custom_call.1}
  #allocation0 [shape = 'u32[]', space=smem, size = 0x4, offset = 0x4, fixed_abs, tag = 'smem constant byte address 0x4 - core index']
  #allocation1 [shape = 'u32[144,128]{1,0:T(1,128)}', space=vmem, size = 0x12000, scoped, tag = 'internal scratch']
  #allocation2 [shape = 'f32[256,128]{1,0:T(8,128)}', space=vmem, size = 0x20000, scoped, tag = 'scratch operand']
  %s0 = inlined_call_operand.vmem [shape: bf16[2,18,16,9], index: 0, kind: input, shape index: {}]
  %s1 = inlined_call_operand.vmem [shape: bf16[3,9,128], index: 1, kind: input, shape index: {}]
  %s2 = inlined_call_operand.vmem [shape: f32[1,128], index: 2, kind: input, shape index: {}]
  %s3 = inlined_call_operand.hbm [shape: f32[2,256,128], index: 3, kind: output, shape index: {}]
  %s4 = sld [smem:[#allocation0]]
  $region45: #{tpu_custom_call.1} parent=0
    _
  %s6 = ssub.s32 1, %s4
  %s7 = scalar_select 0, %s6, %s4
  $region1: #{tpu_custom_call.1} parent=0
    #allocation3 [shape = 'u8[262144]{0}', space=vmem, size = 0x40000, scoped, tag = 'output window, operand 0']
    #allocation4 [shape = 's32[2]{0}', space=sflag, size = 0x8, scoped, tag = 'scoped memory for tpu_custom_call.1']
    %8 = vsyncpa [#allocation4], 0
    %s9 = scalar_lea.sflag [#allocation4], 1
    %10 = vsyncpa %s9, 0
    loop: start=0, step=1, limit=4
    $region2: #{tpu_custom_call.1} parent=1 // loop_pre_header
      _
    $region3: #{tpu_custom_call.1} parent=1 // loop_header
      %s12 = sphi 0, %s16
      %p13 = scmp.ge.s32.totalorder %s12, 4
      %s19 = sphi 0, %s31
      %s20 = sphi 0, %s27
      %s21 = sphi 0, %s19
      %s22 = sphi 0, %s20
      %s23 = sphi 0, %s21
      %s24 = sphi 0, %s22
      %s34 = sphi 0, %s36
      %s37 = sphi 0, %s34
      %s38 = sphi 0, %s37
      %s54 = sphi 0, %s38
      %s60 = sphi 0, %s62
      %s63 = sphi 0, %s60
      %s64 = sphi 0, %s63
      %s80 = sphi 0, %s64
      %s86 = sphi 0, %s88
      %s89 = sphi 0, %s86
      %s90 = sphi 0, %s89
      %s106 = sphi 0, %s90
      %s114 = sphi 0, %s116
      %s117 = sphi 0, %s114
      %s118 = sphi 0, %s117
      %s134 = sphi 0, %s118
    $region4: #{tpu_custom_call.1} parent=1 // loop_header_branch
      %15 = sbr.rel (%p13) target = $region8
    $region5: #{tpu_custom_call.1} parent=1 // loop_body
      %s17 = ssub.s32 %s12, 1
      %s18 = ssub.s32 %s12, 2
      %s25 = sadd.s32 1, %s20
      %p26 = scmp.ge.s32.totalorder %s25, 1
      %s27 = scalar_select %p26, 0, %s25
      %s28 = sadd.s32 1, %s19
      %s29 = scalar_select %p26, %s28, %s19
      %p30 = scmp.ge.s32.totalorder %s29, 2
      %s31 = scalar_select %p30, 0, %s29
      %s32 = ssub.s32 %s19, %s31
      %p33 = scmp.eq.s32.totalorder %s32, 0
      %s35 = sadd.s32 %s34, 1
      %s36 = scalar_select %p33, %s34, %s35
      %p39 = pneg %p33
      %p40 = scmp.eq.s32.totalorder %s12, 1
      %p41 = por %p39, %p40
      %p42 = scmp.ne.s32.totalorder %s34, %s37
      %p43 = scmp.eq.s32.totalorder %s12, 0
      %p44 = por %p42, %p43
      %p45 = scmp.ne.s32.totalorder %s34, %s37
      %p46 = scmp.eq.s32.totalorder %s17, 1
      %p47 = por %p45, %p46
      %p48 = scmp.ne.s32.totalorder %s37, %s38
      %p49 = scmp.eq.s32.totalorder %s17, 0
      %p50 = por %p48, %p49
      %p51 = scmp.ne.s32.totalorder %s37, %s38
      %p52 = scmp.eq.s32.totalorder %s18, 1
      %p53 = por %p51, %p52
      %p55 = scmp.ne.s32.totalorder %s38, %s54
      %p56 = scmp.eq.s32.totalorder %s18, 0
      %p57 = por %p55, %p56
      %s58 = ssub.s32 %s20, %s27
      %p59 = scmp.eq.s32.totalorder %s58, 0
      %s61 = sadd.s32 %s60, 1
      %s62 = scalar_select %p59, %s60, %s61
      %p65 = pneg %p59
      %p66 = scmp.eq.s32.totalorder %s12, 1
      %p67 = por %p65, %p66
      %p68 = scmp.ne.s32.totalorder %s60, %s63
      %p69 = scmp.eq.s32.totalorder %s12, 0
      %p70 = por %p68, %p69
      %p71 = scmp.ne.s32.totalorder %s60, %s63
      %p72 = scmp.eq.s32.totalorder %s17, 1
      %p73 = por %p71, %p72
      %p74 = scmp.ne.s32.totalorder %s63, %s64
      %p75 = scmp.eq.s32.totalorder %s17, 0
      %p76 = por %p74, %p75
      %p77 = scmp.ne.s32.totalorder %s63, %s64
      %p78 = scmp.eq.s32.totalorder %s18, 1
      %p79 = por %p77, %p78
      %p81 = scmp.ne.s32.totalorder %s64, %s80
      %p82 = scmp.eq.s32.totalorder %s18, 0
      %p83 = por %p81, %p82
      %s84 = ssub.s32 %s20, %s27
      %p85 = scmp.eq.s32.totalorder %s84, 0
      %s87 = sadd.s32 %s86, 1
      %s88 = scalar_select %p85, %s86, %s87
      %p91 = pneg %p85
      %p92 = scmp.eq.s32.totalorder %s12, 1
      %p93 = por %p91, %p92
      %p94 = scmp.ne.s32.totalorder %s86, %s89
      %p95 = scmp.eq.s32.totalorder %s12, 0
      %p96 = por %p94, %p95
      %p97 = scmp.ne.s32.totalorder %s86, %s89
      %p98 = scmp.eq.s32.totalorder %s17, 1
      %p99 = por %p97, %p98
      %p100 = scmp.ne.s32.totalorder %s89, %s90
      %p101 = scmp.eq.s32.totalorder %s17, 0
      %p102 = por %p100, %p101
      %p103 = scmp.ne.s32.totalorder %s89, %s90
      %p104 = scmp.eq.s32.totalorder %s18, 1
      %p105 = por %p103, %p104
      %p107 = scmp.ne.s32.totalorder %s90, %s106
      %p108 = scmp.eq.s32.totalorder %s18, 0
      %p109 = por %p107, %p108
      %s110 = ssub.s32 %s19, %s31
      %s111 = ssub.s32 %s20, %s27
      %s112 = sor.u32 %s110, %s111
      %p113 = scmp.eq.s32.totalorder %s112, 0
      %s115 = sadd.s32 %s114, 1
      %s116 = scalar_select %p113, %s114, %s115
      %p119 = pneg %p113
      %p120 = scmp.eq.s32.totalorder %s12, 1
      %p121 = por %p119, %p120
      %p122 = scmp.ne.s32.totalorder %s114, %s117
      %p123 = scmp.eq.s32.totalorder %s12, 0
      %p124 = por %p122, %p123
      %p125 = scmp.ne.s32.totalorder %s114, %s117
      %p126 = scmp.eq.s32.totalorder %s17, 1
      %p127 = por %p125, %p126
      %p128 = scmp.ne.s32.totalorder %s117, %s118
      %p129 = scmp.eq.s32.totalorder %s17, 0
      %p130 = por %p128, %p129
      %p131 = scmp.ne.s32.totalorder %s117, %s118
      %p132 = scmp.eq.s32.totalorder %s18, 1
      %p133 = por %p131, %p132
      %p135 = scmp.ne.s32.totalorder %s118, %s134
      %p136 = scmp.eq.s32.totalorder %s18, 0
      %p137 = por %p135, %p136
      %p138 = scmp.le.s32.totalorder 1, %s12
      %p139 = scmp.lt.s32.totalorder %s12, 3
      %p140 = pnand %p138, %p139
      %p141 = pneg %p140
      // Predicated region
      $region9: #{tpu_custom_call.1} parent=5 // pred_check
        _
      $region10: #{tpu_custom_call.1} parent=5 // pred_check_branch
        %143 = sbr.rel (%p140) target = $region12
      $region11: #{tpu_custom_call.1} parent=5 // pred_region
        %s144 = ssub.s32 %s12, 1
        // Predicated region
        $region13: #{tpu_custom_call.1} parent=11 // pred_check
          %p145 = pneg %p76
        $region14: #{tpu_custom_call.1} parent=11 // pred_check_branch
          %147 = sbr.rel (%p145) target = $region16
        $region15: #{tpu_custom_call.1} parent=11 // pred_region
          %p148 = scmp.lt.s32.totalorder %s22, 0
          %s149 = scalar_select %p148, %s22, 0
          %s150 = smul.addr %s149, 4
          %s151 = scalar_lea.vmem %s1, %s150
        $region16: #{tpu_custom_call.1} parent=11 // pred_fallthru
          _
        // Predicated region
        $region17: #{tpu_custom_call.1} parent=11 // pred_check
          %p152 = pneg %p102
        $region18: #{tpu_custom_call.1} parent=11 // pred_check_branch
          %154 = sbr.rel (%p152) target = $region20
        $region19: #{tpu_custom_call.1} parent=11 // pred_region
          %p155 = scmp.lt.s32.totalorder %s22, 0
          %s156 = scalar_select %p155, %s22, 0
          %s157 = scalar_lea.vmem %s2, %s156
        $region20: #{tpu_custom_call.1} parent=11 // pred_fallthru
          _
      $region12: #{tpu_custom_call.1} parent=5 // pred_fallthru
        _
      %p158 = scmp.lt.s32.totalorder %s12, 2
      // Predicated region
      $region21: #{tpu_custom_call.1} parent=5 // pred_check
        %p159 = pneg %p158
      $region22: #{tpu_custom_call.1} parent=5 // pred_check_branch
        %161 = sbr.rel (%p159) target = $region24
      $region23: #{tpu_custom_call.1} parent=5 // pred_region
        // Predicated region
        $region25: #{tpu_custom_call.1} parent=23 // pred_check
          %p162 = pneg %p44
        $region26: #{tpu_custom_call.1} parent=23 // pred_check_branch
          %164 = sbr.rel (%p162) target = $region28
        $region27: #{tpu_custom_call.1} parent=23 // pred_region
          %p165 = scmp.lt.s32.totalorder %s19, 1
          %s166 = scalar_select %p165, %s19, 1
          %s167 = smul.addr %s166, 36
          %s168 = smul.addr %s167, 4
          %s169 = scalar_lea.vmem %s0, %s168
        $region28: #{tpu_custom_call.1} parent=23 // pred_fallthru
          _
      $region24: #{tpu_custom_call.1} parent=5 // pred_fallthru
        _
      %p170 = scmp.le.s32.totalorder 1, %s12
      %p171 = scmp.lt.s32.totalorder %s12, 3
      %p172 = pnand %p170, %p171
      %p173 = pneg %p172
      // Predicated region
      $region29: #{tpu_custom_call.1} parent=5 // pred_check
        _
      $region30: #{tpu_custom_call.1} parent=5 // pred_check_branch
        %175 = sbr.rel (%p172) target = $region32
      $region31: #{tpu_custom_call.1} parent=5 // pred_region
        %s176 = ssub.s32 %s12, 1
        %p177 = scmp.lt.s32.totalorder %s21, 1
        %s178 = scalar_select %p177, %s21, 1
        %s179 = smul.addr %s178, 36
        %s180 = smul.addr %s179, 4
        %s181 = scalar_lea.vmem %s0, %s180
        %p182 = pneg %p50
        %p183 = pneg %p47
        %p184 = scmp.lt.s32.totalorder %s22, 0
        %s185 = scalar_select %p184, %s22, 0
        %s186 = smul.addr %s185, 4
        %s187 = scalar_lea.vmem %s1, %s186
        %p188 = pneg %p76
        %p189 = pneg %p73
        %p190 = scmp.lt.s32.totalorder %s22, 0
        %s191 = scalar_select %p190, %s22, 0
        %s192 = scalar_lea.vmem %s2, %s191
        %p193 = pneg %p102
        %p194 = pneg %p99
        %p195 = pneg %p130
        %p196 = pneg %p127
        %s197 = sand.u32 %s117, 1
        %s198 = scalar_lea.sflag [#allocation4], %s197
        %s199 = sand.u32 %s117, 1
        %s200 = smul.addr %s199, 256
        %s201 = scalar_lea.vmem [#allocation3], %s200
        %p202 = scmp.lt.s32.totalorder %s21, 1
        %s203 = scalar_select %p202, %s21, 1
        %s204 = smul.addr %s203, 36
        %s205 = smul.addr %s204, 4
        %s206 = scalar_lea.vmem %s0, %s205
        %p207 = scmp.lt.s32.totalorder %s22, 0
        %s208 = scalar_select %p207, %s22, 0
        %s209 = smul.addr %s208, 4
        %s210 = scalar_lea.vmem %s1, %s209
        %p211 = scmp.lt.s32.totalorder %s22, 0
        %s212 = scalar_select %p211, %s22, 0
        %s213 = scalar_lea.vmem %s2, %s212
        %v215 = vld [vmem:[%s206] sm:$0xf]
        %v216 = vld [vmem:[%s206 + $0x4] sm:$0xf]
        %v217 = vld [vmem:[%s206 + $0x8] sm:$0xf]
        %v218 = vld [vmem:[%s206 + $0xc] sm:$0xf]
        %v219 = vld [vmem:[%s206 + $0x10] sm:$0xf]
        %v220 = vld [vmem:[%s206 + $0x14] sm:$0xf]
        %v221 = vld [vmem:[%s206 + $0x18] sm:$0xf]
        %v222 = vld [vmem:[%s206 + $0x1c] sm:$0xf]
        %v223 = vld [vmem:[%s206 + $0x20] sm:$0xf]
        %v224 = vld [vmem:[%s206 + $0x24] sm:$0xf]
        %v225 = vld [vmem:[%s206 + $0x28] sm:$0xf]
        %v226 = vld [vmem:[%s206 + $0x2c] sm:$0xf]
        %v227 = vld [vmem:[%s206 + $0x30] sm:$0xf]
        %v228 = vld [vmem:[%s206 + $0x34] sm:$0xf]
        %v229 = vld [vmem:[%s206 + $0x38] sm:$0xf]
        %v230 = vld [vmem:[%s206 + $0x3c] sm:$0xf]
        %v231 = vld [vmem:[%s206 + $0x40] sm:$0xf]
        %v232 = vld [vmem:[%s206 + $0x44] sm:$0xf]
        %v233 = vld [vmem:[%s206 + $0x48] sm:$0xf]
        %v234 = vld [vmem:[%s206 + $0x4c] sm:$0xf]
        %v235 = vld [vmem:[%s206 + $0x50] sm:$0xf]
        %v236 = vld [vmem:[%s206 + $0x54] sm:$0xf]
        %v237 = vld [vmem:[%s206 + $0x58] sm:$0xf]
        %v238 = vld [vmem:[%s206 + $0x5c] sm:$0xf]
        %v239 = vld [vmem:[%s206 + $0x60] sm:$0xf]
        %v240 = vld [vmem:[%s206 + $0x64] sm:$0xf]
        %v241 = vld [vmem:[%s206 + $0x68] sm:$0xf]
        %v242 = vld [vmem:[%s206 + $0x6c] sm:$0xf]
        %v243 = vld [vmem:[%s206 + $0x70] sm:$0xf]
        %v244 = vld [vmem:[%s206 + $0x74] sm:$0xf]
        %v245 = vld [vmem:[%s206 + $0x78] sm:$0xf]
        %v246 = vld [vmem:[%s206 + $0x7c] sm:$0xf]
        %v247 = vld [vmem:[%s210] sm:$0xf]
        %v248 = vld [vmem:[%s210 + $0x4] sm:$0x1]
        %v281 = vunpack.c.l.b16 %v215
        %v282 = vunpack.c.l.b16 %v216
        %v283 = vunpack.c.l.b16 %v217
        %v284 = vunpack.c.l.b16 %v218
        %v285 = vunpack.c.l.b16 %v219
        %v286 = vunpack.c.l.b16 %v220
        %v287 = vunpack.c.l.b16 %v221
        %v288 = vunpack.c.l.b16 %v222
        %v289 = vunpack.c.l.b16 %v223
        %v290 = vunpack.c.l.b16 %v224
        %v291 = vunpack.c.l.b16 %v225
        %v292 = vunpack.c.l.b16 %v226
        %v293 = vunpack.c.l.b16 %v227
        %v294 = vunpack.c.l.b16 %v228
        %v295 = vunpack.c.l.b16 %v229
        %v296 = vunpack.c.l.b16 %v230
        %v297 = vunpack.c.l.b16 %v231
        %v298 = vunpack.c.l.b16 %v232
        %v299 = vunpack.c.l.b16 %v233
        %v300 = vunpack.c.l.b16 %v234
        %v301 = vunpack.c.l.b16 %v235
        %v302 = vunpack.c.l.b16 %v236
        %v303 = vunpack.c.l.b16 %v237
        %v304 = vunpack.c.l.b16 %v238
        %v305 = vunpack.c.l.b16 %v239
        %v306 = vunpack.c.l.b16 %v240
        %v307 = vunpack.c.l.b16 %v241
        %v308 = vunpack.c.l.b16 %v242
        %v309 = vunpack.c.l.b16 %v243
        %v310 = vunpack.c.l.b16 %v244
        %v311 = vunpack.c.l.b16 %v245
        %v312 = vunpack.c.l.b16 %v246
        %v313 = vpack.c.b16 %v282, %v281
        %v314 = vpack.c.b16 %v284, %v283
        %v315 = vpack.c.b16 %v286, %v285
        %v316 = vpack.c.b16 %v288, %v287
        %v317 = vpack.c.b16 %v290, %v289
        %v318 = vpack.c.b16 %v292, %v291
        %v319 = vpack.c.b16 %v294, %v293
        %v320 = vpack.c.b16 %v296, %v295
        %v321 = vpack.c.b16 %v298, %v297
        %v322 = vpack.c.b16 %v300, %v299
        %v323 = vpack.c.b16 %v302, %v301
        %v324 = vpack.c.b16 %v304, %v303
        %v325 = vpack.c.b16 %v306, %v305
        %v326 = vpack.c.b16 %v308, %v307
        %v327 = vpack.c.b16 %v310, %v309
        %v328 = vpack.c.b16 %v312, %v311
        %v331 = vunpack.c.l.b16 %v247
        %v332 = vunpack.c.l.b16 %v248
        %v333 = vpack.c.b16 %v332, %v331
        %vm334 = vcmask 72704
        %v336 = vsel %vm334, %v313, 0
        %v339 = vsel %vm334, %v314, 0
        %v342 = vsel %vm334, %v315, 0
        %v345 = vsel %vm334, %v316, 0
        %v348 = vsel %vm334, %v317, 0
        %v351 = vsel %vm334, %v318, 0
        %v354 = vsel %vm334, %v319, 0
        %v357 = vsel %vm334, %v320, 0
        %v360 = vsel %vm334, %v321, 0
        %v363 = vsel %vm334, %v322, 0
        %v366 = vsel %vm334, %v323, 0
        %v369 = vsel %vm334, %v324, 0
        %v372 = vsel %vm334, %v325, 0
        %v375 = vsel %vm334, %v326, 0
        %v378 = vsel %vm334, %v327, 0
        %v381 = vsel %vm334, %v328, 0
        %vm383 = vcmask 1043456
        %vm384 = vcmask 1044480
        %v385 = vsel %vm383, 4294967295, 65535
        %v386 = vsel %vm384, %v385, 0
        %v388 = vand.u32 %v333, %v386
        %390 = vmatprep.subr.bf16.mxu0 0
        %391 = vmatpush1.bf16.msra.mxu0 %v388
        %392 = vmatprep.subr.bf16.mxu0 0
        %393 = vmatpush1.bf16.msra.mxu0 0
        %394 = vmatprep.subr.bf16.mxu0 0
        %395 = vmatpush1.bf16.msra.mxu0 0
        %396 = vmatprep.subr.bf16.mxu0 0
        %397 = vmatpush1.bf16.msra.mxu0 0
        %398 = vmatprep.subr.bf16.mxu0 0
        %399 = vmatpush1.bf16.msra.mxu0 0
        %400 = vmatprep.subr.bf16.mxu0 0
        %401 = vmatpush1.bf16.msra.mxu0 0
        %402 = vmatprep.subr.bf16.mxu0 0
        %403 = vmatpush1.bf16.msra.mxu0 0
        %404 = vmatprep.subr.bf16.mxu0 0
        %405 = vmatpush1.bf16.msra.mxu0 0
        %406 = vmatprep.subr.bf16.mxu0 0
        %407 = vmatpush1.bf16.msra.mxu0 0
        %408 = vmatprep.subr.bf16.mxu0 0
        %409 = vmatpush1.bf16.msra.mxu0 0
        %410 = vmatprep.subr.bf16.mxu0 0
        %411 = vmatpush1.bf16.msra.mxu0 0
        %412 = vmatprep.subr.bf16.mxu0 0
        %413 = vmatpush1.bf16.msra.mxu0 0
        %414 = vmatprep.subr.bf16.mxu0 0
        %415 = vmatpush1.bf16.msra.mxu0 0
        %416 = vmatprep.subr.bf16.mxu0 0
        %417 = vmatpush1.bf16.msra.mxu0 0
        %418 = vmatprep.subr.bf16.mxu0 0
        %419 = vmatpush1.bf16.msra.mxu0 0
        %420 = vmatprep.subr.bf16.mxu0 0
        %421 = vmatpush1.bf16.msra.mxu0 0
        %422 = vmatprep.mubr.bf16.mxu0 0
        %423 = vmatmul.mubr.bf16.gmra.mrb[0].mxu0 %v336
        %v424 = vpop.f32.mrb[0].mxu0
        %v425 = vadd.f32 0.0, %v424
        %v426 = vpop.f32.mrb[0].mxu0
        %v427 = vpop.f32.mrb[0].mxu0
        %v428 = vadd.f32 0.0, %v427
        %v429 = vpop.f32.mrb[0].mxu0
        %430 = vmatprep.mubr.bf16.mxu0 0
        %431 = vmatmul.mubr.bf16.gmra.mrb[0].mxu0 %v339
        %v432 = vpop.f32.mrb[0].mxu0
        %v433 = vadd.f32 0.0, %v432
        %v434 = vpop.f32.mrb[0].mxu0
        %v435 = vpop.f32.mrb[0].mxu0
        %v436 = vadd.f32 0.0, %v435
        %v437 = vpop.f32.mrb[0].mxu0
        %438 = vmatprep.mubr.bf16.mxu0 0
        %439 = vmatmul.mubr.bf16.gmra.mrb[0].mxu0 %v342
        %v440 = vpop.f32.mrb[0].mxu0
        %v441 = vadd.f32 0.0, %v440
        %v442 = vpop.f32.mrb[0].mxu0
        %v443 = vpop.f32.mrb[0].mxu0
        %v444 = vadd.f32 0.0, %v443
        %v445 = vpop.f32.mrb[0].mxu0
        %446 = vmatprep.mubr.bf16.mxu0 0
        %447 = vmatmul.mubr.bf16.gmra.mrb[0].mxu0 %v345
        %v448 = vpop.f32.mrb[0].mxu0
        %v449 = vadd.f32 0.0, %v448
        %v450 = vpop.f32.mrb[0].mxu0
        %v451 = vpop.f32.mrb[0].mxu0
        %v452 = vadd.f32 0.0, %v451
        %v453 = vpop.f32.mrb[0].mxu0
        %454 = vmatprep.mubr.bf16.mxu0 0
        %455 = vmatmul.mubr.bf16.gmra.mrb[0].mxu0 %v348
        %v456 = vpop.f32.mrb[0].mxu0
        %v457 = vadd.f32 0.0, %v456
        %v458 = vpop.f32.mrb[0].mxu0
        %v459 = vpop.f32.mrb[0].mxu0
        %v460 = vadd.f32 0.0, %v459
        %v461 = vpop.f32.mrb[0].mxu0
        %462 = vmatprep.mubr.bf16.mxu0 0
        %463 = vmatmul.mubr.bf16.gmra.mrb[0].mxu0 %v351
        %v464 = vpop.f32.mrb[0].mxu0
        %v465 = vadd.f32 0.0, %v464
        %v466 = vpop.f32.mrb[0].mxu0
        %v467 = vpop.f32.mrb[0].mxu0
        %v468 = vadd.f32 0.0, %v467
        %v469 = vpop.f32.mrb[0].mxu0
        %470 = vmatprep.mubr.bf16.mxu0 0
        %471 = vmatmul.mubr.bf16.gmra.mrb[0].mxu0 %v354
        %v472 = vpop.f32.mrb[0].mxu0
        %v473 = vadd.f32 0.0, %v472
        %v474 = vpop.f32.mrb[0].mxu0
        %v475 = vpop.f32.mrb[0].mxu0
        %v476 = vadd.f32 0.0, %v475
        %v477 = vpop.f32.mrb[0].mxu0
        %478 = vmatprep.mubr.bf16.mxu0 0
        %479 = vmatmul.mubr.bf16.gmra.mrb[0].mxu0 %v357
        %v480 = vpop.f32.mrb[0].mxu0
        %v481 = vadd.f32 0.0, %v480
        %v482 = vpop.f32.mrb[0].mxu0
        %v483 = vpop.f32.mrb[0].mxu0
        %v484 = vadd.f32 0.0, %v483
        %v485 = vpop.f32.mrb[0].mxu0
        %486 = vmatprep.mubr.bf16.mxu0 0
        %487 = vmatmul.mubr.bf16.gmra.mrb[0].mxu0 %v360
        %v488 = vpop.f32.mrb[0].mxu0
        %v489 = vadd.f32 0.0, %v488
        %v490 = vpop.f32.mrb[0].mxu0
        %v491 = vpop.f32.mrb[0].mxu0
        %v492 = vadd.f32 0.0, %v491
        %v493 = vpop.f32.mrb[0].mxu0
        %494 = vmatprep.mubr.bf16.mxu0 0
        %495 = vmatmul.mubr.bf16.gmra.mrb[0].mxu0 %v363
        %v496 = vpop.f32.mrb[0].mxu0
        %v497 = vadd.f32 0.0, %v496
        %v498 = vpop.f32.mrb[0].mxu0
        %v499 = vpop.f32.mrb[0].mxu0
        %v500 = vadd.f32 0.0, %v499
        %v501 = vpop.f32.mrb[0].mxu0
        %502 = vmatprep.mubr.bf16.mxu0 0
        %503 = vmatmul.mubr.bf16.gmra.mrb[0].mxu0 %v366
        %v504 = vpop.f32.mrb[0].mxu0
        %v505 = vadd.f32 0.0, %v504
        %v506 = vpop.f32.mrb[0].mxu0
        %v507 = vpop.f32.mrb[0].mxu0
        %v508 = vadd.f32 0.0, %v507
        %v509 = vpop.f32.mrb[0].mxu0
        %510 = vmatprep.mubr.bf16.mxu0 0
        %511 = vmatmul.mubr.bf16.gmra.mrb[0].mxu0 %v369
        %v512 = vpop.f32.mrb[0].mxu0
        %v513 = vadd.f32 0.0, %v512
        %v514 = vpop.f32.mrb[0].mxu0
        %v515 = vpop.f32.mrb[0].mxu0
        %v516 = vadd.f32 0.0, %v515
        %v517 = vpop.f32.mrb[0].mxu0
        %518 = vmatprep.mubr.bf16.mxu0 0
        %519 = vmatmul.mubr.bf16.gmra.mrb[0].mxu0 %v372
        %v520 = vpop.f32.mrb[0].mxu0
        %v521 = vadd.f32 0.0, %v520
        %v522 = vpop.f32.mrb[0].mxu0
        %v523 = vpop.f32.mrb[0].mxu0
        %v524 = vadd.f32 0.0, %v523
        %v525 = vpop.f32.mrb[0].mxu0
        %526 = vmatprep.mubr.bf16.mxu0 0
        %527 = vmatmul.mubr.bf16.gmra.mrb[0].mxu0 %v375
        %v528 = vpop.f32.mrb[0].mxu0
        %v529 = vadd.f32 0.0, %v528
        %v530 = vpop.f32.mrb[0].mxu0
        %v531 = vpop.f32.mrb[0].mxu0
        %v532 = vadd.f32 0.0, %v531
        %v533 = vpop.f32.mrb[0].mxu0
        %534 = vmatprep.mubr.bf16.mxu0 0
        %535 = vmatmul.mubr.bf16.gmra.mrb[0].mxu0 %v378
        %v536 = vpop.f32.mrb[0].mxu0
        %v537 = vadd.f32 0.0, %v536
        %v538 = vpop.f32.mrb[0].mxu0
        %v539 = vpop.f32.mrb[0].mxu0
        %v540 = vadd.f32 0.0, %v539
        %v541 = vpop.f32.mrb[0].mxu0
        %542 = vmatprep.mubr.bf16.mxu0 0
        %543 = vmatmul.mubr.bf16.gmra.mrb[0].mxu0 %v381
        %v544 = vpop.f32.mrb[0].mxu0
        %v545 = vadd.f32 0.0, %v544
        %v546 = vpop.f32.mrb[0].mxu0
        %v547 = vpop.f32.mrb[0].mxu0
        %v548 = vadd.f32 0.0, %v547
        %v549 = vpop.f32.mrb[0].mxu0
        %550 = vdwg.mxu0
        %551 = vst [vmem:[#allocation2] sm:$0xff] %v425
        %552 = vst [vmem:[#allocation2 + $0x8] sm:$0xff] %v428
        %553 = vst [vmem:[#allocation2 + $0x10] sm:$0xff] %v433
        %554 = vst [vmem:[#allocation2 + $0x18] sm:$0xff] %v436
        %555 = vst [vmem:[#allocation2 + $0x20] sm:$0xff] %v441
        %556 = vst [vmem:[#allocation2 + $0x28] sm:$0xff] %v444
        %557 = vst [vmem:[#allocation2 + $0x30] sm:$0xff] %v449
        %558 = vst [vmem:[#allocation2 + $0x38] sm:$0xff] %v452
        %559 = vst [vmem:[#allocation2 + $0x40] sm:$0xff] %v457
        %560 = vst [vmem:[#allocation2 + $0x48] sm:$0xff] %v460
        %561 = vst [vmem:[#allocation2 + $0x50] sm:$0xff] %v465
        %562 = vst [vmem:[#allocation2 + $0x58] sm:$0xff] %v468
        %563 = vst [vmem:[#allocation2 + $0x60] sm:$0xff] %v473
        %564 = vst [vmem:[#allocation2 + $0x68] sm:$0xff] %v476
        %565 = vst [vmem:[#allocation2 + $0x70] sm:$0xff] %v481
        %566 = vst [vmem:[#allocation2 + $0x78] sm:$0xff] %v484
        %567 = vst [vmem:[#allocation2 + $0x80] sm:$0xff] %v489
        %568 = vst [vmem:[#allocation2 + $0x88] sm:$0xff] %v492
        %569 = vst [vmem:[#allocation2 + $0x90] sm:$0xff] %v497
        %570 = vst [vmem:[#allocation2 + $0x98] sm:$0xff] %v500
        %571 = vst [vmem:[#allocation2 + $0xa0] sm:$0xff] %v505
        %572 = vst [vmem:[#allocation2 + $0xa8] sm:$0xff] %v508
        %573 = vst [vmem:[#allocation2 + $0xb0] sm:$0xff] %v513
        %574 = vst [vmem:[#allocation2 + $0xb8] sm:$0xff] %v516
        %575 = vst [vmem:[#allocation2 + $0xc0] sm:$0xff] %v521
        %576 = vst [vmem:[#allocation2 + $0xc8] sm:$0xff] %v524
        %577 = vst [vmem:[#allocation2 + $0xd0] sm:$0xff] %v529
        %578 = vst [vmem:[#allocation2 + $0xd8] sm:$0xff] %v532
        %579 = vst [vmem:[#allocation2 + $0xe0] sm:$0xff] %v537
        %580 = vst [vmem:[#allocation2 + $0xe8] sm:$0xff] %v540
        %581 = vst [vmem:[#allocation2 + $0xf0] sm:$0xff] %v545
        %582 = vst [vmem:[#allocation2 + $0xf8] sm:$0xff] %v548
        %s583 = scalar_lea.vmem %s206, 8
        %v584 = vld [vmem:[%s583] sm:$0xf]
        %v585 = vld [vmem:[%s583 + $0x4] sm:$0xf]
        %v586 = vld [vmem:[%s583 + $0x8] sm:$0xf]
        %v587 = vld [vmem:[%s583 + $0xc] sm:$0xf]
        %v588 = vld [vmem:[%s583 + $0x10] sm:$0xf]
        %v589 = vld [vmem:[%s583 + $0x14] sm:$0xf]
        %v590 = vld [vmem:[%s583 + $0x18] sm:$0xf]
        %v591 = vld [vmem:[%s583 + $0x1c] sm:$0xf]
        %v592 = vld [vmem:[%s583 + $0x20] sm:$0xf]
        %v593 = vld [vmem:[%s583 + $0x24] sm:$0xf]
        %v594 = vld [vmem:[%s583 + $0x28] sm:$0xf]
        %v595 = vld [vmem:[%s583 + $0x2c] sm:$0xf]
        %v596 = vld [vmem:[%s583 + $0x30] sm:$0xf]
        %v597 = vld [vmem:[%s583 + $0x34] sm:$0xf]
        %v598 = vld [vmem:[%s583 + $0x38] sm:$0xf]
        %v599 = vld [vmem:[%s583 + $0x3c] sm:$0xf]
        %v600 = vld [vmem:[%s583 + $0x40] sm:$0xf]
        %v601 = vld [vmem:[%s583 + $0x44] sm:$0xf]
        %v602 = vld [vmem:[%s583 + $0x48] sm:$0xf]
        %v603 = vld [vmem:[%s583 + $0x4c] sm:$0xf]
        %v604 = vld [vmem:[%s583 + $0x50] sm:$0xf]
        %v605 = vld [vmem:[%s583 + $0x54] sm:$0xf]
        %v606 = vld [vmem:[%s583 + $0x58] sm:$0xf]
        %v607 = vld [vmem:[%s583 + $0x5c] sm:$0xf]
        %v608 = vld [vmem:[%s583 + $0x60] sm:$0xf]
        %v609 = vld [vmem:[%s583 + $0x64] sm:$0xf]
        %v610 = vld [vmem:[%s583 + $0x68] sm:$0xf]
        %v611 = vld [vmem:[%s583 + $0x6c] sm:$0xf]
        %v612 = vld [vmem:[%s583 + $0x70] sm:$0xf]
        %v613 = vld [vmem:[%s583 + $0x74] sm:$0xf]
        %v614 = vld [vmem:[%s583 + $0x78] sm:$0xf]
        %v615 = vld [vmem:[%s583 + $0x7c] sm:$0xf]
        %s616 = scalar_lea.vmem %s210, 8
        %v617 = vld [vmem:[%s616] sm:$0xf]
        %v618 = vld [vmem:[%s616 + $0x4] sm:$0x1]
        %v651 = vunpack.c.l.b16 %v584
        %v652 = vunpack.c.l.b16 %v585
        %v653 = vunpack.c.l.b16 %v586
        %v654 = vunpack.c.l.b16 %v587
        %v655 = vunpack.c.l.b16 %v588
        %v656 = vunpack.c.l.b16 %v589
        %v657 = vunpack.c.l.b16 %v590
        %v658 = vunpack.c.l.b16 %v591
        %v659 = vunpack.c.l.b16 %v592
        %v660 = vunpack.c.l.b16 %v593
        %v661 = vunpack.c.l.b16 %v594
        %v662 = vunpack.c.l.b16 %v595
        %v663 = vunpack.c.l.b16 %v596
        %v664 = vunpack.c.l.b16 %v597
        %v665 = vunpack.c.l.b16 %v598
        %v666 = vunpack.c.l.b16 %v599
        %v667 = vunpack.c.l.b16 %v600
        %v668 = vunpack.c.l.b16 %v601
        %v669 = vunpack.c.l.b16 %v602
        %v670 = vunpack.c.l.b16 %v603
        %v671 = vunpack.c.l.b16 %v604
        %v672 = vunpack.c.l.b16 %v605
        %v673 = vunpack.c.l.b16 %v606
        %v674 = vunpack.c.l.b16 %v607
        %v675 = vunpack.c.l.b16 %v608
        %v676 = vunpack.c.l.b16 %v609
        %v677 = vunpack.c.l.b16 %v610
        %v678 = vunpack.c.l.b16 %v611
        %v679 = vunpack.c.l.b16 %v612
        %v680 = vunpack.c.l.b16 %v613
        %v681 = vunpack.c.l.b16 %v614
        %v682 = vunpack.c.l.b16 %v615
        %v683 = vpack.c.b16 %v652, %v651
        %v684 = vpack.c.b16 %v654, %v653
        %v685 = vpack.c.b16 %v656, %v655
        %v686 = vpack.c.b16 %v658, %v657
        %v687 = vpack.c.b16 %v660, %v659
        %v688 = vpack.c.b16 %v662, %v661
        %v689 = vpack.c.b16 %v664, %v663
        %v690 = vpack.c.b16 %v666, %v665
        %v691 = vpack.c.b16 %v668, %v667
        %v692 = vpack.c.b16 %v670, %v669
        %v693 = vpack.c.b16 %v672, %v671
        %v694 = vpack.c.b16 %v674, %v673
        %v695 = vpack.c.b16 %v676, %v675
        %v696 = vpack.c.b16 %v678, %v677
        %v697 = vpack.c.b16 %v680, %v679
        %v698 = vpack.c.b16 %v682, %v681
        %v701 = vunpack.c.l.b16 %v617
        %v702 = vunpack.c.l.b16 %v618
        %v703 = vpack.c.b16 %v702, %v701
        %v705 = vsel %vm334, %v683, 0
        %v708 = vsel %vm334, %v684, 0
        %v711 = vsel %vm334, %v685, 0
        %v714 = vsel %vm334, %v686, 0
        %v717 = vsel %vm334, %v687, 0
        %v720 = vsel %vm334, %v688, 0
        %v723 = vsel %vm334, %v689, 0
        %v726 = vsel %vm334, %v690, 0
        %v729 = vsel %vm334, %v691, 0
        %v732 = vsel %vm334, %v692, 0
        %v735 = vsel %vm334, %v693, 0
        %v738 = vsel %vm334, %v694, 0
        %v741 = vsel %vm334, %v695, 0
        %v744 = vsel %vm334, %v696, 0
        %v747 = vsel %vm334, %v697, 0
        %v750 = vsel %vm334, %v698, 0
        %v753 = vand.u32 %v703, %v386
        %755 = vmatprep.subr.bf16.mxu0 0
        %756 = vmatpush1.bf16.msra.mxu0 %v753
        %757 = vmatprep.subr.bf16.mxu0 0
        %758 = vmatpush1.bf16.msra.mxu0 0
        %759 = vmatprep.subr.bf16.mxu0 0
        %760 = vmatpush1.bf16.msra.mxu0 0
        %761 = vmatprep.subr.bf16.mxu0 0
        %762 = vmatpush1.bf16.msra.mxu0 0
        %763 = vmatprep.subr.bf16.mxu0 0
        %764 = vmatpush1.bf16.msra.mxu0 0
        %765 = vmatprep.subr.bf16.mxu0 0
        %766 = vmatpush1.bf16.msra.mxu0 0
        %767 = vmatprep.subr.bf16.mxu0 0
        %768 = vmatpush1.bf16.msra.mxu0 0
        %769 = vmatprep.subr.bf16.mxu0 0
        %770 = vmatpush1.bf16.msra.mxu0 0
        %771 = vmatprep.subr.bf16.mxu0 0
        %772 = vmatpush1.bf16.msra.mxu0 0
        %773 = vmatprep.subr.bf16.mxu0 0
        %774 = vmatpush1.bf16.msra.mxu0 0
        %775 = vmatprep.subr.bf16.mxu0 0
        %776 = vmatpush1.bf16.msra.mxu0 0
        %777 = vmatprep.subr.bf16.mxu0 0
        %778 = vmatpush1.bf16.msra.mxu0 0
        %779 = vmatprep.subr.bf16.mxu0 0
        %780 = vmatpush1.bf16.msra.mxu0 0
        %781 = vmatprep.subr.bf16.mxu0 0
        %782 = vmatpush1.bf16.msra.mxu0 0
        %783 = vmatprep.subr.bf16.mxu0 0
        %784 = vmatpush1.bf16.msra.mxu0 0
        %785 = vmatprep.subr.bf16.mxu0 0
        %786 = vmatpush1.bf16.msra.mxu0 0
        %787 = vmatprep.mubr.bf16.mxu0 0
        %788 = vmatmul.mubr.bf16.gmra.mrb[0].mxu0 %v705
        %v789 = vpop.f32.mrb[0].mxu0
        %v790 = vadd.f32 0.0, %v789
        %v791 = vpop.f32.mrb[0].mxu0
        %v792 = vpop.f32.mrb[0].mxu0
        %v793 = vadd.f32 0.0, %v792
        %v794 = vpop.f32.mrb[0].mxu0
        %795 = vmatprep.mubr.bf16.mxu0 0
        %796 = vmatmul.mubr.bf16.gmra.mrb[0].mxu0 %v708
        %v797 = vpop.f32.mrb[0].mxu0
        %v798 = vadd.f32 0.0, %v797
        %v799 = vpop.f32.mrb[0].mxu0
        %v800 = vpop.f32.mrb[0].mxu0
        %v801 = vadd.f32 0.0, %v800
        %v802 = vpop.f32.mrb[0].mxu0
        %803 = vmatprep.mubr.bf16.mxu0 0
        %804 = vmatmul.mubr.bf16.gmra.mrb[0].mxu0 %v711
        %v805 = vpop.f32.mrb[0].mxu0
        %v806 = vadd.f32 0.0, %v805
        %v807 = vpop.f32.mrb[0].mxu0
        %v808 = vpop.f32.mrb[0].mxu0
        %v809 = vadd.f32 0.0, %v808
        %v810 = vpop.f32.mrb[0].mxu0
        %811 = vmatprep.mubr.bf16.mxu0 0
        %812 = vmatmul.mubr.bf16.gmra.mrb[0].mxu0 %v714
        %v813 = vpop.f32.mrb[0].mxu0
        %v814 = vadd.f32 0.0, %v813
        %v815 = vpop.f32.mrb[0].mxu0
        %v816 = vpop.f32.mrb[0].mxu0
        %v817 = vadd.f32 0.0, %v816
        %v818 = vpop.f32.mrb[0].mxu0
        %819 = vmatprep.mubr.bf16.mxu0 0
        %820 = vmatmul.mubr.bf16.gmra.mrb[0].mxu0 %v717
        %v821 = vpop.f32.mrb[0].mxu0
        %v822 = vadd.f32 0.0, %v821
        %v823 = vpop.f32.mrb[0].mxu0
        %v824 = vpop.f32.mrb[0].mxu0
        %v825 = vadd.f32 0.0, %v824
        %v826 = vpop.f32.mrb[0].mxu0
        %827 = vmatprep.mubr.bf16.mxu0 0
        %828 = vmatmul.mubr.bf16.gmra.mrb[0].mxu0 %v720
        %v829 = vpop.f32.mrb[0].mxu0
        %v830 = vadd.f32 0.0, %v829
        %v831 = vpop.f32.mrb[0].mxu0
        %v832 = vpop.f32.mrb[0].mxu0
        %v833 = vadd.f32 0.0, %v832
        %v834 = vpop.f32.mrb[0].mxu0
        %835 = vmatprep.mubr.bf16.mxu0 0
        %836 = vmatmul.mubr.bf16.gmra.mrb[0].mxu0 %v723
        %v837 = vpop.f32.mrb[0].mxu0
        %v838 = vadd.f32 0.0, %v837
        %v839 = vpop.f32.mrb[0].mxu0
        %v840 = vpop.f32.mrb[0].mxu0
        %v841 = vadd.f32 0.0, %v840
        %v842 = vpop.f32.mrb[0].mxu0
        %843 = vmatprep.mubr.bf16.mxu0 0
        %844 = vmatmul.mubr.bf16.gmra.mrb[0].mxu0 %v726
        %v845 = vpop.f32.mrb[0].mxu0
        %v846 = vadd.f32 0.0, %v845
        %v847 = vpop.f32.mrb[0].mxu0
        %v848 = vpop.f32.mrb[0].mxu0
        %v849 = vadd.f32 0.0, %v848
        %v850 = vpop.f32.mrb[0].mxu0
        %851 = vmatprep.mubr.bf16.mxu0 0
        %852 = vmatmul.mubr.bf16.gmra.mrb[0].mxu0 %v729
        %v853 = vpop.f32.mrb[0].mxu0
        %v854 = vadd.f32 0.0, %v853
        %v855 = vpop.f32.mrb[0].mxu0
        %v856 = vpop.f32.mrb[0].mxu0
        %v857 = vadd.f32 0.0, %v856
        %v858 = vpop.f32.mrb[0].mxu0
        %859 = vmatprep.mubr.bf16.mxu0 0
        %860 = vmatmul.mubr.bf16.gmra.mrb[0].mxu0 %v732
        %v861 = vpop.f32.mrb[0].mxu0
        %v862 = vadd.f32 0.0, %v861
        %v863 = vpop.f32.mrb[0].mxu0
        %v864 = vpop.f32.mrb[0].mxu0
        %v865 = vadd.f32 0.0, %v864
        %v866 = vpop.f32.mrb[0].mxu0
        %867 = vmatprep.mubr.bf16.mxu0 0
        %868 = vmatmul.mubr.bf16.gmra.mrb[0].mxu0 %v735
        %v869 = vpop.f32.mrb[0].mxu0
        %v870 = vadd.f32 0.0, %v869
        %v871 = vpop.f32.mrb[0].mxu0
        %v872 = vpop.f32.mrb[0].mxu0
        %v873 = vadd.f32 0.0, %v872
        %v874 = vpop.f32.mrb[0].mxu0
        %875 = vmatprep.mubr.bf16.mxu0 0
        %876 = vmatmul.mubr.bf16.gmra.mrb[0].mxu0 %v738
        %v877 = vpop.f32.mrb[0].mxu0
        %v878 = vadd.f32 0.0, %v877
        %v879 = vpop.f32.mrb[0].mxu0
        %v880 = vpop.f32.mrb[0].mxu0
        %v881 = vadd.f32 0.0, %v880
        %v882 = vpop.f32.mrb[0].mxu0
        %883 = vmatprep.mubr.bf16.mxu0 0
        %884 = vmatmul.mubr.bf16.gmra.mrb[0].mxu0 %v741
        %v885 = vpop.f32.mrb[0].mxu0
        %v886 = vadd.f32 0.0, %v885
        %v887 = vpop.f32.mrb[0].mxu0
        %v888 = vpop.f32.mrb[0].mxu0
        %v889 = vadd.f32 0.0, %v888
        %v890 = vpop.f32.mrb[0].mxu0
        %891 = vmatprep.mubr.bf16.mxu0 0
        %892 = vmatmul.mubr.bf16.gmra.mrb[0].mxu0 %v744
        %v893 = vpop.f32.mrb[0].mxu0
        %v894 = vadd.f32 0.0, %v893
        %v895 = vpop.f32.mrb[0].mxu0
        %v896 = vpop.f32.mrb[0].mxu0
        %v897 = vadd.f32 0.0, %v896
        %v898 = vpop.f32.mrb[0].mxu0
        %899 = vmatprep.mubr.bf16.mxu0 0
        %900 = vmatmul.mubr.bf16.gmra.mrb[0].mxu0 %v747
        %v901 = vpop.f32.mrb[0].mxu0
        %v902 = vadd.f32 0.0, %v901
        %v903 = vpop.f32.mrb[0].mxu0
        %v904 = vpop.f32.mrb[0].mxu0
        %v905 = vadd.f32 0.0, %v904
        %v906 = vpop.f32.mrb[0].mxu0
        %907 = vmatprep.mubr.bf16.mxu0 0
        %908 = vmatmul.mubr.bf16.gmra.mrb[0].mxu0 %v750
        %v909 = vpop.f32.mrb[0].mxu0
        %v910 = vadd.f32 0.0, %v909
        %v911 = vpop.f32.mrb[0].mxu0
        %v912 = vpop.f32.mrb[0].mxu0
        %v913 = vadd.f32 0.0, %v912
        %v914 = vpop.f32.mrb[0].mxu0
        %915 = vdwg.mxu0
        %v916 = vld [vmem:[#allocation2] sm:$0xff]
        %v917 = vld [vmem:[#allocation2 + $0x8] sm:$0xff]
        %v918 = vld [vmem:[#allocation2 + $0x10] sm:$0xff]
        %v919 = vld [vmem:[#allocation2 + $0x18] sm:$0xff]
        %v920 = vld [vmem:[#allocation2 + $0x20] sm:$0xff]
        %v921 = vld [vmem:[#allocation2 + $0x28] sm:$0xff]
        %v922 = vld [vmem:[#allocation2 + $0x30] sm:$0xff]
        %v923 = vld [vmem:[#allocation2 + $0x38] sm:$0xff]
        %v924 = vld [vmem:[#allocation2 + $0x40] sm:$0xff]
        %v925 = vld [vmem:[#allocation2 + $0x48] sm:$0xff]
        %v926 = vld [vmem:[#allocation2 + $0x50] sm:$0xff]
        %v927 = vld [vmem:[#allocation2 + $0x58] sm:$0xff]
        %v928 = vld [vmem:[#allocation2 + $0x60] sm:$0xff]
        %v929 = vld [vmem:[#allocation2 + $0x68] sm:$0xff]
        %v930 = vld [vmem:[#allocation2 + $0x70] sm:$0xff]
        %v931 = vld [vmem:[#allocation2 + $0x78] sm:$0xff]
        %v932 = vld [vmem:[#allocation2 + $0x80] sm:$0xff]
        %v933 = vld [vmem:[#allocation2 + $0x88] sm:$0xff]
        %v934 = vld [vmem:[#allocation2 + $0x90] sm:$0xff]
        %v935 = vld [vmem:[#allocation2 + $0x98] sm:$0xff]
        %v936 = vld [vmem:[#allocation2 + $0xa0] sm:$0xff]
        %v937 = vld [vmem:[#allocation2 + $0xa8] sm:$0xff]
        %v938 = vld [vmem:[#allocation2 + $0xb0] sm:$0xff]
        %v939 = vld [vmem:[#allocation2 + $0xb8] sm:$0xff]
        %v940 = vld [vmem:[#allocation2 + $0xc0] sm:$0xff]
        %v941 = vld [vmem:[#allocation2 + $0xc8] sm:$0xff]
        %v942 = vld [vmem:[#allocation2 + $0xd0] sm:$0xff]
        %v943 = vld [vmem:[#allocation2 + $0xd8] sm:$0xff]
        %v944 = vld [vmem:[#allocation2 + $0xe0] sm:$0xff]
        %v945 = vld [vmem:[#allocation2 + $0xe8] sm:$0xff]
        %v946 = vld [vmem:[#allocation2 + $0xf0] sm:$0xff]
        %v947 = vld [vmem:[#allocation2 + $0xf8] sm:$0xff]
        %v948 = vadd.f32 %v916, %v790
        %v949 = vadd.f32 %v917, %v793
        %v950 = vadd.f32 %v918, %v798
        %v951 = vadd.f32 %v919, %v801
        %v952 = vadd.f32 %v920, %v806
        %v953 = vadd.f32 %v921, %v809
        %v954 = vadd.f32 %v922, %v814
        %v955 = vadd.f32 %v923, %v817
        %v956 = vadd.f32 %v924, %v822
        %v957 = vadd.f32 %v925, %v825
        %v958 = vadd.f32 %v926, %v830
        %v959 = vadd.f32 %v927, %v833
        %v960 = vadd.f32 %v928, %v838
        %v961 = vadd.f32 %v929, %v841
        %v962 = vadd.f32 %v930, %v846
        %v963 = vadd.f32 %v931, %v849
        %v964 = vadd.f32 %v932, %v854
        %v965 = vadd.f32 %v933, %v857
        %v966 = vadd.f32 %v934, %v862
        %v967 = vadd.f32 %v935, %v865
        %v968 = vadd.f32 %v936, %v870
        %v969 = vadd.f32 %v937, %v873
        %v970 = vadd.f32 %v938, %v878
        %v971 = vadd.f32 %v939, %v881
        %v972 = vadd.f32 %v940, %v886
        %v973 = vadd.f32 %v941, %v889
        %v974 = vadd.f32 %v942, %v894
        %v975 = vadd.f32 %v943, %v897
        %v976 = vadd.f32 %v944, %v902
        %v977 = vadd.f32 %v945, %v905
        %v978 = vadd.f32 %v946, %v910
        %v979 = vadd.f32 %v947, %v913
        %980 = vst [vmem:[#allocation2] sm:$0xff] %v948
        %981 = vst [vmem:[#allocation2 + $0x8] sm:$0xff] %v949
        %982 = vst [vmem:[#allocation2 + $0x10] sm:$0xff] %v950
        %983 = vst [vmem:[#allocation2 + $0x18] sm:$0xff] %v951
        %984 = vst [vmem:[#allocation2 + $0x20] sm:$0xff] %v952
        %985 = vst [vmem:[#allocation2 + $0x28] sm:$0xff] %v953
        %986 = vst [vmem:[#allocation2 + $0x30] sm:$0xff] %v954
        %987 = vst [vmem:[#allocation2 + $0x38] sm:$0xff] %v955
        %988 = vst [vmem:[#allocation2 + $0x40] sm:$0xff] %v956
        %989 = vst [vmem:[#allocation2 + $0x48] sm:$0xff] %v957
        %990 = vst [vmem:[#allocation2 + $0x50] sm:$0xff] %v958
        %991 = vst [vmem:[#allocation2 + $0x58] sm:$0xff] %v959
        %992 = vst [vmem:[#allocation2 + $0x60] sm:$0xff] %v960
        %993 = vst [vmem:[#allocation2 + $0x68] sm:$0xff] %v961
        %994 = vst [vmem:[#allocation2 + $0x70] sm:$0xff] %v962
        %995 = vst [vmem:[#allocation2 + $0x78] sm:$0xff] %v963
        %996 = vst [vmem:[#allocation2 + $0x80] sm:$0xff] %v964
        %997 = vst [vmem:[#allocation2 + $0x88] sm:$0xff] %v965
        %998 = vst [vmem:[#allocation2 + $0x90] sm:$0xff] %v966
        %999 = vst [vmem:[#allocation2 + $0x98] sm:$0xff] %v967
        %1000 = vst [vmem:[#allocation2 + $0xa0] sm:$0xff] %v968
        %1001 = vst [vmem:[#allocation2 + $0xa8] sm:$0xff] %v969
        %1002 = vst [vmem:[#allocation2 + $0xb0] sm:$0xff] %v970
        %1003 = vst [vmem:[#allocation2 + $0xb8] sm:$0xff] %v971
        %1004 = vst [vmem:[#allocation2 + $0xc0] sm:$0xff] %v972
        %1005 = vst [vmem:[#allocation2 + $0xc8] sm:$0xff] %v973
        %1006 = vst [vmem:[#allocation2 + $0xd0] sm:$0xff] %v974
        %1007 = vst [vmem:[#allocation2 + $0xd8] sm:$0xff] %v975
        %1008 = vst [vmem:[#allocation2 + $0xe0] sm:$0xff] %v976
        %1009 = vst [vmem:[#allocation2 + $0xe8] sm:$0xff] %v977
        %1010 = vst [vmem:[#allocation2 + $0xf0] sm:$0xff] %v978
        %1011 = vst [vmem:[#allocation2 + $0xf8] sm:$0xff] %v979
        %s1012 = scalar_lea.vmem %s206, 16
        %v1013 = vld [vmem:[%s1012] sm:$0xf]
        %v1014 = vld [vmem:[%s1012 + $0x4] sm:$0xf]
        %v1015 = vld [vmem:[%s1012 + $0x8] sm:$0xf]
        %v1016 = vld [vmem:[%s1012 + $0xc] sm:$0xf]
        %v1017 = vld [vmem:[%s1012 + $0x10] sm:$0xf]
        %v1018 = vld [vmem:[%s1012 + $0x14] sm:$0xf]
        %v1019 = vld [vmem:[%s1012 + $0x18] sm:$0xf]
        %v1020 = vld [vmem:[%s1012 + $0x1c] sm:$0xf]
        %v1021 = vld [vmem:[%s1012 + $0x20] sm:$0xf]
        %v1022 = vld [vmem:[%s1012 + $0x24] sm:$0xf]
        %v1023 = vld [vmem:[%s1012 + $0x28] sm:$0xf]
        %v1024 = vld [vmem:[%s1012 + $0x2c] sm:$0xf]
        %v1025 = vld [vmem:[%s1012 + $0x30] sm:$0xf]
        %v1026 = vld [vmem:[%s1012 + $0x34] sm:$0xf]
        %v1027 = vld [vmem:[%s1012 + $0x38] sm:$0xf]
        %v1028 = vld [vmem:[%s1012 + $0x3c] sm:$0xf]
        %v1029 = vld [vmem:[%s1012 + $0x40] sm:$0xf]
        %v1030 = vld [vmem:[%s1012 + $0x44] sm:$0xf]
        %v1031 = vld [vmem:[%s1012 + $0x48] sm:$0xf]
        %v1032 = vld [vmem:[%s1012 + $0x4c] sm:$0xf]
        %v1033 = vld [vmem:[%s1012 + $0x50] sm:$0xf]
        %v1034 = vld [vmem:[%s1012 + $0x54] sm:$0xf]
        %v1035 = vld [vmem:[%s1012 + $0x58] sm:$0xf]
        %v1036 = vld [vmem:[%s1012 + $0x5c] sm:$0xf]
        %v1037 = vld [vmem:[%s1012 + $0x60] sm:$0xf]
        %v1038 = vld [vmem:[%s1012 + $0x64] sm:$0xf]
        %v1039 = vld [vmem:[%s1012 + $0x68] sm:$0xf]
        %v1040 = vld [vmem:[%s1012 + $0x6c] sm:$0xf]
        %v1041 = vld [vmem:[%s1012 + $0x70] sm:$0xf]
        %v1042 = vld [vmem:[%s1012 + $0x74] sm:$0xf]
        %v1043 = vld [vmem:[%s1012 + $0x78] sm:$0xf]
        %v1044 = vld [vmem:[%s1012 + $0x7c] sm:$0xf]
        %s1045 = scalar_lea.vmem %s210, 16
        %v1046 = vld [vmem:[%s1045] sm:$0xf]
        %v1047 = vld [vmem:[%s1045 + $0x4] sm:$0x1]
        %v1080 = vunpack.c.l.b16 %v1013
        %v1081 = vunpack.c.l.b16 %v1014
        %v1082 = vunpack.c.l.b16 %v1015
        %v1083 = vunpack.c.l.b16 %v1016
        %v1084 = vunpack.c.l.b16 %v1017
        %v1085 = vunpack.c.l.b16 %v1018
        %v1086 = vunpack.c.l.b16 %v1019
        %v1087 = vunpack.c.l.b16 %v1020
        %v1088 = vunpack.c.l.b16 %v1021
        %v1089 = vunpack.c.l.b16 %v1022
        %v1090 = vunpack.c.l.b16 %v1023
        %v1091 = vunpack.c.l.b16 %v1024
        %v1092 = vunpack.c.l.b16 %v1025
        %v1093 = vunpack.c.l.b16 %v1026
        %v1094 = vunpack.c.l.b16 %v1027
        %v1095 = vunpack.c.l.b16 %v1028
        %v1096 = vunpack.c.l.b16 %v1029
        %v1097 = vunpack.c.l.b16 %v1030
        %v1098 = vunpack.c.l.b16 %v1031
        %v1099 = vunpack.c.l.b16 %v1032
        %v1100 = vunpack.c.l.b16 %v1033
        %v1101 = vunpack.c.l.b16 %v1034
        %v1102 = vunpack.c.l.b16 %v1035
        %v1103 = vunpack.c.l.b16 %v1036
        %v1104 = vunpack.c.l.b16 %v1037
        %v1105 = vunpack.c.l.b16 %v1038
        %v1106 = vunpack.c.l.b16 %v1039
        %v1107 = vunpack.c.l.b16 %v1040
        %v1108 = vunpack.c.l.b16 %v1041
        %v1109 = vunpack.c.l.b16 %v1042
        %v1110 = vunpack.c.l.b16 %v1043
        %v1111 = vunpack.c.l.b16 %v1044
        %v1112 = vpack.c.b16 %v1081, %v1080
        %v1113 = vpack.c.b16 %v1083, %v1082
        %v1114 = vpack.c.b16 %v1085, %v1084
        %v1115 = vpack.c.b16 %v1087, %v1086
        %v1116 = vpack.c.b16 %v1089, %v1088
        %v1117 = vpack.c.b16 %v1091, %v1090
        %v1118 = vpack.c.b16 %v1093, %v1092
        %v1119 = vpack.c.b16 %v1095, %v1094
        %v1120 = vpack.c.b16 %v1097, %v1096
        %v1121 = vpack.c.b16 %v1099, %v1098
        %v1122 = vpack.c.b16 %v1101, %v1100
        %v1123 = vpack.c.b16 %v1103, %v1102
        %v1124 = vpack.c.b16 %v1105, %v1104
        %v1125 = vpack.c.b16 %v1107, %v1106
        %v1126 = vpack.c.b16 %v1109, %v1108
        %v1127 = vpack.c.b16 %v1111, %v1110
        %v1130 = vunpack.c.l.b16 %v1046
        %v1131 = vunpack.c.l.b16 %v1047
        %v1132 = vpack.c.b16 %v1131, %v1130
        %v1134 = vsel %vm334, %v1112, 0
        %v1137 = vsel %vm334, %v1113, 0
        %v1140 = vsel %vm334, %v1114, 0
        %v1143 = vsel %vm334, %v1115, 0
        %v1146 = vsel %vm334, %v1116, 0
        %v1149 = vsel %vm334, %v1117, 0
        %v1152 = vsel %vm334, %v1118, 0
        %v1155 = vsel %vm334, %v1119, 0
        %v1158 = vsel %vm334, %v1120, 0
        %v1161 = vsel %vm334, %v1121, 0
        %v1164 = vsel %vm334, %v1122, 0
        %v1167 = vsel %vm334, %v1123, 0
        %v1170 = vsel %vm334, %v1124, 0
        %v1173 = vsel %vm334, %v1125, 0
        %v1176 = vsel %vm334, %v1126, 0
        %v1179 = vsel %vm334, %v1127, 0
        %v1182 = vand.u32 %v1132, %v386
        %1184 = vmatprep.subr.bf16.mxu0 0
        %1185 = vmatpush1.bf16.msra.mxu0 %v1182
        %1186 = vmatprep.subr.bf16.mxu0 0
        %1187 = vmatpush1.bf16.msra.mxu0 0
        %1188 = vmatprep.subr.bf16.mxu0 0
        %1189 = vmatpush1.bf16.msra.mxu0 0
        %1190 = vmatprep.subr.bf16.mxu0 0
        %1191 = vmatpush1.bf16.msra.mxu0 0
        %1192 = vmatprep.subr.bf16.mxu0 0
        %1193 = vmatpush1.bf16.msra.mxu0 0
        %1194 = vmatprep.subr.bf16.mxu0 0
        %1195 = vmatpush1.bf16.msra.mxu0 0
        %1196 = vmatprep.subr.bf16.mxu0 0
        %1197 = vmatpush1.bf16.msra.mxu0 0
        %1198 = vmatprep.subr.bf16.mxu0 0
        %1199 = vmatpush1.bf16.msra.mxu0 0
        %1200 = vmatprep.subr.bf16.mxu0 0
        %1201 = vmatpush1.bf16.msra.mxu0 0
        %1202 = vmatprep.subr.bf16.mxu0 0
        %1203 = vmatpush1.bf16.msra.mxu0 0
        %1204 = vmatprep.subr.bf16.mxu0 0
        %1205 = vmatpush1.bf16.msra.mxu0 0
        %1206 = vmatprep.subr.bf16.mxu0 0
        %1207 = vmatpush1.bf16.msra.mxu0 0
        %1208 = vmatprep.subr.bf16.mxu0 0
        %1209 = vmatpush1.bf16.msra.mxu0 0
        %1210 = vmatprep.subr.bf16.mxu0 0
        %1211 = vmatpush1.bf16.msra.mxu0 0
        %1212 = vmatprep.subr.bf16.mxu0 0
        %1213 = vmatpush1.bf16.msra.mxu0 0
        %1214 = vmatprep.subr.bf16.mxu0 0
        %1215 = vmatpush1.bf16.msra.mxu0 0
        %1216 = vmatprep.mubr.bf16.mxu0 0
        %1217 = vmatmul.mubr.bf16.gmra.mrb[0].mxu0 %v1134
        %v1218 = vpop.f32.mrb[0].mxu0
        %v1219 = vadd.f32 0.0, %v1218
        %v1220 = vpop.f32.mrb[0].mxu0
        %v1221 = vpop.f32.mrb[0].mxu0
        %v1222 = vadd.f32 0.0, %v1221
        %v1223 = vpop.f32.mrb[0].mxu0
        %1224 = vmatprep.mubr.bf16.mxu0 0
        %1225 = vmatmul.mubr.bf16.gmra.mrb[0].mxu0 %v1137
        %v1226 = vpop.f32.mrb[0].mxu0
        %v1227 = vadd.f32 0.0, %v1226
        %v1228 = vpop.f32.mrb[0].mxu0
        %v1229 = vpop.f32.mrb[0].mxu0
        %v1230 = vadd.f32 0.0, %v1229
        %v1231 = vpop.f32.mrb[0].mxu0
        %1232 = vmatprep.mubr.bf16.mxu0 0
        %1233 = vmatmul.mubr.bf16.gmra.mrb[0].mxu0 %v1140
        %v1234 = vpop.f32.mrb[0].mxu0
        %v1235 = vadd.f32 0.0, %v1234
        %v1236 = vpop.f32.mrb[0].mxu0
        %v1237 = vpop.f32.mrb[0].mxu0
        %v1238 = vadd.f32 0.0, %v1237
        %v1239 = vpop.f32.mrb[0].mxu0
        %1240 = vmatprep.mubr.bf16.mxu0 0
        %1241 = vmatmul.mubr.bf16.gmra.mrb[0].mxu0 %v1143
        %v1242 = vpop.f32.mrb[0].mxu0
        %v1243 = vadd.f32 0.0, %v1242
        %v1244 = vpop.f32.mrb[0].mxu0
        %v1245 = vpop.f32.mrb[0].mxu0
        %v1246 = vadd.f32 0.0, %v1245
        %v1247 = vpop.f32.mrb[0].mxu0
        %1248 = vmatprep.mubr.bf16.mxu0 0
        %1249 = vmatmul.mubr.bf16.gmra.mrb[0].mxu0 %v1146
        %v1250 = vpop.f32.mrb[0].mxu0
        %v1251 = vadd.f32 0.0, %v1250
        %v1252 = vpop.f32.mrb[0].mxu0
        %v1253 = vpop.f32.mrb[0].mxu0
        %v1254 = vadd.f32 0.0, %v1253
        %v1255 = vpop.f32.mrb[0].mxu0
        %1256 = vmatprep.mubr.bf16.mxu0 0
        %1257 = vmatmul.mubr.bf16.gmra.mrb[0].mxu0 %v1149
        %v1258 = vpop.f32.mrb[0].mxu0
        %v1259 = vadd.f32 0.0, %v1258
        %v1260 = vpop.f32.mrb[0].mxu0
        %v1261 = vpop.f32.mrb[0].mxu0
        %v1262 = vadd.f32 0.0, %v1261
        %v1263 = vpop.f32.mrb[0].mxu0
        %1264 = vmatprep.mubr.bf16.mxu0 0
        %1265 = vmatmul.mubr.bf16.gmra.mrb[0].mxu0 %v1152
        %v1266 = vpop.f32.mrb[0].mxu0
        %v1267 = vadd.f32 0.0, %v1266
        %v1268 = vpop.f32.mrb[0].mxu0
        %v1269 = vpop.f32.mrb[0].mxu0
        %v1270 = vadd.f32 0.0, %v1269
        %v1271 = vpop.f32.mrb[0].mxu0
        %1272 = vmatprep.mubr.bf16.mxu0 0
        %1273 = vmatmul.mubr.bf16.gmra.mrb[0].mxu0 %v1155
        %v1274 = vpop.f32.mrb[0].mxu0
        %v1275 = vadd.f32 0.0, %v1274
        %v1276 = vpop.f32.mrb[0].mxu0
        %v1277 = vpop.f32.mrb[0].mxu0
        %v1278 = vadd.f32 0.0, %v1277
        %v1279 = vpop.f32.mrb[0].mxu0
        %1280 = vmatprep.mubr.bf16.mxu0 0
        %1281 = vmatmul.mubr.bf16.gmra.mrb[0].mxu0 %v1158
        %v1282 = vpop.f32.mrb[0].mxu0
        %v1283 = vadd.f32 0.0, %v1282
        %v1284 = vpop.f32.mrb[0].mxu0
        %v1285 = vpop.f32.mrb[0].mxu0
        %v1286 = vadd.f32 0.0, %v1285
        %v1287 = vpop.f32.mrb[0].mxu0
        %1288 = vmatprep.mubr.bf16.mxu0 0
        %1289 = vmatmul.mubr.bf16.gmra.mrb[0].mxu0 %v1161
        %v1290 = vpop.f32.mrb[0].mxu0
        %v1291 = vadd.f32 0.0, %v1290
        %v1292 = vpop.f32.mrb[0].mxu0
        %v1293 = vpop.f32.mrb[0].mxu0
        %v1294 = vadd.f32 0.0, %v1293
        %v1295 = vpop.f32.mrb[0].mxu0
        %1296 = vmatprep.mubr.bf16.mxu0 0
        %1297 = vmatmul.mubr.bf16.gmra.mrb[0].mxu0 %v1164
        %v1298 = vpop.f32.mrb[0].mxu0
        %v1299 = vadd.f32 0.0, %v1298
        %v1300 = vpop.f32.mrb[0].mxu0
        %v1301 = vpop.f32.mrb[0].mxu0
        %v1302 = vadd.f32 0.0, %v1301
        %v1303 = vpop.f32.mrb[0].mxu0
        %1304 = vmatprep.mubr.bf16.mxu0 0
        %1305 = vmatmul.mubr.bf16.gmra.mrb[0].mxu0 %v1167
        %v1306 = vpop.f32.mrb[0].mxu0
        %v1307 = vadd.f32 0.0, %v1306
        %v1308 = vpop.f32.mrb[0].mxu0
        %v1309 = vpop.f32.mrb[0].mxu0
        %v1310 = vadd.f32 0.0, %v1309
        %v1311 = vpop.f32.mrb[0].mxu0
        %1312 = vmatprep.mubr.bf16.mxu0 0
        %1313 = vmatmul.mubr.bf16.gmra.mrb[0].mxu0 %v1170
        %v1314 = vpop.f32.mrb[0].mxu0
        %v1315 = vadd.f32 0.0, %v1314
        %v1316 = vpop.f32.mrb[0].mxu0
        %v1317 = vpop.f32.mrb[0].mxu0
        %v1318 = vadd.f32 0.0, %v1317
        %v1319 = vpop.f32.mrb[0].mxu0
        %1320 = vmatprep.mubr.bf16.mxu0 0
        %1321 = vmatmul.mubr.bf16.gmra.mrb[0].mxu0 %v1173
        %v1322 = vpop.f32.mrb[0].mxu0
        %v1323 = vadd.f32 0.0, %v1322
        %v1324 = vpop.f32.mrb[0].mxu0
        %v1325 = vpop.f32.mrb[0].mxu0
        %v1326 = vadd.f32 0.0, %v1325
        %v1327 = vpop.f32.mrb[0].mxu0
        %1328 = vmatprep.mubr.bf16.mxu0 0
        %1329 = vmatmul.mubr.bf16.gmra.mrb[0].mxu0 %v1176
        %v1330 = vpop.f32.mrb[0].mxu0
        %v1331 = vadd.f32 0.0, %v1330
        %v1332 = vpop.f32.mrb[0].mxu0
        %v1333 = vpop.f32.mrb[0].mxu0
        %v1334 = vadd.f32 0.0, %v1333
        %v1335 = vpop.f32.mrb[0].mxu0
        %1336 = vmatprep.mubr.bf16.mxu0 0
        %1337 = vmatmul.mubr.bf16.gmra.mrb[0].mxu0 %v1179
        %v1338 = vpop.f32.mrb[0].mxu0
        %v1339 = vadd.f32 0.0, %v1338
        %v1340 = vpop.f32.mrb[0].mxu0
        %v1341 = vpop.f32.mrb[0].mxu0
        %v1342 = vadd.f32 0.0, %v1341
        %v1343 = vpop.f32.mrb[0].mxu0
        %1344 = vdwg.mxu0
        %v1345 = vld [vmem:[#allocation2] sm:$0xff]
        %v1346 = vld [vmem:[#allocation2 + $0x8] sm:$0xff]
        %v1347 = vld [vmem:[#allocation2 + $0x10] sm:$0xff]
        %v1348 = vld [vmem:[#allocation2 + $0x18] sm:$0xff]
        %v1349 = vld [vmem:[#allocation2 + $0x20] sm:$0xff]
        %v1350 = vld [vmem:[#allocation2 + $0x28] sm:$0xff]
        %v1351 = vld [vmem:[#allocation2 + $0x30] sm:$0xff]
        %v1352 = vld [vmem:[#allocation2 + $0x38] sm:$0xff]
        %v1353 = vld [vmem:[#allocation2 + $0x40] sm:$0xff]
        %v1354 = vld [vmem:[#allocation2 + $0x48] sm:$0xff]
        %v1355 = vld [vmem:[#allocation2 + $0x50] sm:$0xff]
        %v1356 = vld [vmem:[#allocation2 + $0x58] sm:$0xff]
        %v1357 = vld [vmem:[#allocation2 + $0x60] sm:$0xff]
        %v1358 = vld [vmem:[#allocation2 + $0x68] sm:$0xff]
        %v1359 = vld [vmem:[#allocation2 + $0x70] sm:$0xff]
        %v1360 = vld [vmem:[#allocation2 + $0x78] sm:$0xff]
        %v1361 = vld [vmem:[#allocation2 + $0x80] sm:$0xff]
        %v1362 = vld [vmem:[#allocation2 + $0x88] sm:$0xff]
        %v1363 = vld [vmem:[#allocation2 + $0x90] sm:$0xff]
        %v1364 = vld [vmem:[#allocation2 + $0x98] sm:$0xff]
        %v1365 = vld [vmem:[#allocation2 + $0xa0] sm:$0xff]
        %v1366 = vld [vmem:[#allocation2 + $0xa8] sm:$0xff]
        %v1367 = vld [vmem:[#allocation2 + $0xb0] sm:$0xff]
        %v1368 = vld [vmem:[#allocation2 + $0xb8] sm:$0xff]
        %v1369 = vld [vmem:[#allocation2 + $0xc0] sm:$0xff]
        %v1370 = vld [vmem:[#allocation2 + $0xc8] sm:$0xff]
        %v1371 = vld [vmem:[#allocation2 + $0xd0] sm:$0xff]
        %v1372 = vld [vmem:[#allocation2 + $0xd8] sm:$0xff]
        %v1373 = vld [vmem:[#allocation2 + $0xe0] sm:$0xff]
        %v1374 = vld [vmem:[#allocation2 + $0xe8] sm:$0xff]
        %v1375 = vld [vmem:[#allocation2 + $0xf0] sm:$0xff]
        %v1376 = vld [vmem:[#allocation2 + $0xf8] sm:$0xff]
        %v1377 = vadd.f32 %v1345, %v1219
        %v1378 = vadd.f32 %v1346, %v1222
        %v1379 = vadd.f32 %v1347, %v1227
        %v1380 = vadd.f32 %v1348, %v1230
        %v1381 = vadd.f32 %v1349, %v1235
        %v1382 = vadd.f32 %v1350, %v1238
        %v1383 = vadd.f32 %v1351, %v1243
        %v1384 = vadd.f32 %v1352, %v1246
        %v1385 = vadd.f32 %v1353, %v1251
        %v1386 = vadd.f32 %v1354, %v1254
        %v1387 = vadd.f32 %v1355, %v1259
        %v1388 = vadd.f32 %v1356, %v1262
        %v1389 = vadd.f32 %v1357, %v1267
        %v1390 = vadd.f32 %v1358, %v1270
        %v1391 = vadd.f32 %v1359, %v1275
        %v1392 = vadd.f32 %v1360, %v1278
        %v1393 = vadd.f32 %v1361, %v1283
        %v1394 = vadd.f32 %v1362, %v1286
        %v1395 = vadd.f32 %v1363, %v1291
        %v1396 = vadd.f32 %v1364, %v1294
        %v1397 = vadd.f32 %v1365, %v1299
        %v1398 = vadd.f32 %v1366, %v1302
        %v1399 = vadd.f32 %v1367, %v1307
        %v1400 = vadd.f32 %v1368, %v1310
        %v1401 = vadd.f32 %v1369, %v1315
        %v1402 = vadd.f32 %v1370, %v1318
        %v1403 = vadd.f32 %v1371, %v1323
        %v1404 = vadd.f32 %v1372, %v1326
        %v1405 = vadd.f32 %v1373, %v1331
        %v1406 = vadd.f32 %v1374, %v1334
        %v1407 = vadd.f32 %v1375, %v1339
        %v1408 = vadd.f32 %v1376, %v1342
        %1409 = vst [vmem:[#allocation2] sm:$0xff] %v1377
        %1410 = vst [vmem:[#allocation2 + $0x8] sm:$0xff] %v1378
        %1411 = vst [vmem:[#allocation2 + $0x10] sm:$0xff] %v1379
        %1412 = vst [vmem:[#allocation2 + $0x18] sm:$0xff] %v1380
        %1413 = vst [vmem:[#allocation2 + $0x20] sm:$0xff] %v1381
        %1414 = vst [vmem:[#allocation2 + $0x28] sm:$0xff] %v1382
        %1415 = vst [vmem:[#allocation2 + $0x30] sm:$0xff] %v1383
        %1416 = vst [vmem:[#allocation2 + $0x38] sm:$0xff] %v1384
        %1417 = vst [vmem:[#allocation2 + $0x40] sm:$0xff] %v1385
        %1418 = vst [vmem:[#allocation2 + $0x48] sm:$0xff] %v1386
        %1419 = vst [vmem:[#allocation2 + $0x50] sm:$0xff] %v1387
        %1420 = vst [vmem:[#allocation2 + $0x58] sm:$0xff] %v1388
        %1421 = vst [vmem:[#allocation2 + $0x60] sm:$0xff] %v1389
        %1422 = vst [vmem:[#allocation2 + $0x68] sm:$0xff] %v1390
        %1423 = vst [vmem:[#allocation2 + $0x70] sm:$0xff] %v1391
        %1424 = vst [vmem:[#allocation2 + $0x78] sm:$0xff] %v1392
        %1425 = vst [vmem:[#allocation2 + $0x80] sm:$0xff] %v1393
        %1426 = vst [vmem:[#allocation2 + $0x88] sm:$0xff] %v1394
        %1427 = vst [vmem:[#allocation2 + $0x90] sm:$0xff] %v1395
        %1428 = vst [vmem:[#allocation2 + $0x98] sm:$0xff] %v1396
        %1429 = vst [vmem:[#allocation2 + $0xa0] sm:$0xff] %v1397
        %1430 = vst [vmem:[#allocation2 + $0xa8] sm:$0xff] %v1398
        %1431 = vst [vmem:[#allocation2 + $0xb0] sm:$0xff] %v1399
        %1432 = vst [vmem:[#allocation2 + $0xb8] sm:$0xff] %v1400
        %1433 = vst [vmem:[#allocation2 + $0xc0] sm:$0xff] %v1401
        %1434 = vst [vmem:[#allocation2 + $0xc8] sm:$0xff] %v1402
        %1435 = vst [vmem:[#allocation2 + $0xd0] sm:$0xff] %v1403
        %1436 = vst [vmem:[#allocation2 + $0xd8] sm:$0xff] %v1404
        %1437 = vst [vmem:[#allocation2 + $0xe0] sm:$0xff] %v1405
        %1438 = vst [vmem:[#allocation2 + $0xe8] sm:$0xff] %v1406
        %1439 = vst [vmem:[#allocation2 + $0xf0] sm:$0xff] %v1407
        %1440 = vst [vmem:[#allocation2 + $0xf8] sm:$0xff] %v1408
        %v1441 = vld [vmem:[#allocation2] sm:$0xff]
        %v1442 = vld [vmem:[#allocation2 + $0x8] sm:$0xff]
        %v1443 = vld [vmem:[#allocation2 + $0x10] sm:$0xff]
        %v1444 = vld [vmem:[#allocation2 + $0x18] sm:$0xff]
        %v1445 = vld [vmem:[#allocation2 + $0x20] sm:$0xff]
        %v1446 = vld [vmem:[#allocation2 + $0x28] sm:$0xff]
        %v1447 = vld [vmem:[#allocation2 + $0x30] sm:$0xff]
        %v1448 = vld [vmem:[#allocation2 + $0x38] sm:$0xff]
        %v1449 = vld [vmem:[#allocation2 + $0x40] sm:$0xff]
        %v1450 = vld [vmem:[#allocation2 + $0x48] sm:$0xff]
        %v1451 = vld [vmem:[#allocation2 + $0x50] sm:$0xff]
        %v1452 = vld [vmem:[#allocation2 + $0x58] sm:$0xff]
        %v1453 = vld [vmem:[#allocation2 + $0x60] sm:$0xff]
        %v1454 = vld [vmem:[#allocation2 + $0x68] sm:$0xff]
        %v1455 = vld [vmem:[#allocation2 + $0x70] sm:$0xff]
        %v1456 = vld [vmem:[#allocation2 + $0x78] sm:$0xff]
        %v1457 = vld [vmem:[#allocation2 + $0x80] sm:$0xff]
        %v1458 = vld [vmem:[#allocation2 + $0x88] sm:$0xff]
        %v1459 = vld [vmem:[#allocation2 + $0x90] sm:$0xff]
        %v1460 = vld [vmem:[#allocation2 + $0x98] sm:$0xff]
        %v1461 = vld [vmem:[#allocation2 + $0xa0] sm:$0xff]
        %v1462 = vld [vmem:[#allocation2 + $0xa8] sm:$0xff]
        %v1463 = vld [vmem:[#allocation2 + $0xb0] sm:$0xff]
        %v1464 = vld [vmem:[#allocation2 + $0xb8] sm:$0xff]
        %v1465 = vld [vmem:[#allocation2 + $0xc0] sm:$0xff]
        %v1466 = vld [vmem:[#allocation2 + $0xc8] sm:$0xff]
        %v1467 = vld [vmem:[#allocation2 + $0xd0] sm:$0xff]
        %v1468 = vld [vmem:[#allocation2 + $0xd8] sm:$0xff]
        %v1469 = vld [vmem:[#allocation2 + $0xe0] sm:$0xff]
        %v1470 = vld [vmem:[#allocation2 + $0xe8] sm:$0xff]
        %v1471 = vld [vmem:[#allocation2 + $0xf0] sm:$0xff]
        %v1472 = vld [vmem:[#allocation2 + $0xf8] sm:$0xff]
        %v1473 = vld [vmem:[%s213] sm:$0x1]
        %v1475 = vlaneseq
        %v1476 = vshrl.u32 %v1475, 7
        %v1477 = vsub.s32 0, %v1476
        %v1478 = vrot.slane %v1473, %v1477
        %v1480 = vadd.f32 %v1441, %v1478
        %v1481 = vadd.f32 %v1442, %v1478
        %v1482 = vadd.f32 %v1443, %v1478
        %v1483 = vadd.f32 %v1444, %v1478
        %v1484 = vadd.f32 %v1445, %v1478
        %v1485 = vadd.f32 %v1446, %v1478
        %v1486 = vadd.f32 %v1447, %v1478
        %v1487 = vadd.f32 %v1448, %v1478
        %v1488 = vadd.f32 %v1449, %v1478
        %v1489 = vadd.f32 %v1450, %v1478
        %v1490 = vadd.f32 %v1451, %v1478
        %v1491 = vadd.f32 %v1452, %v1478
        %v1492 = vadd.f32 %v1453, %v1478
        %v1493 = vadd.f32 %v1454, %v1478
        %v1494 = vadd.f32 %v1455, %v1478
        %v1495 = vadd.f32 %v1456, %v1478
        %v1496 = vadd.f32 %v1457, %v1478
        %v1497 = vadd.f32 %v1458, %v1478
        %v1498 = vadd.f32 %v1459, %v1478
        %v1499 = vadd.f32 %v1460, %v1478
        %v1500 = vadd.f32 %v1461, %v1478
        %v1501 = vadd.f32 %v1462, %v1478
        %v1502 = vadd.f32 %v1463, %v1478
        %v1503 = vadd.f32 %v1464, %v1478
        %v1504 = vadd.f32 %v1465, %v1478
        %v1505 = vadd.f32 %v1466, %v1478
        %v1506 = vadd.f32 %v1467, %v1478
        %v1507 = vadd.f32 %v1468, %v1478
        %v1508 = vadd.f32 %v1469, %v1478
        %v1509 = vadd.f32 %v1470, %v1478
        %v1510 = vadd.f32 %v1471, %v1478
        %v1511 = vadd.f32 %v1472, %v1478
        %v1512 = vmax.f32 %v1480, 0.0
        %v1513 = vmax.f32 %v1481, 0.0
        %v1514 = vmax.f32 %v1482, 0.0
        %v1515 = vmax.f32 %v1483, 0.0
        %v1516 = vmax.f32 %v1484, 0.0
        %v1517 = vmax.f32 %v1485, 0.0
        %v1518 = vmax.f32 %v1486, 0.0
        %v1519 = vmax.f32 %v1487, 0.0
        %v1520 = vmax.f32 %v1488, 0.0
        %v1521 = vmax.f32 %v1489, 0.0
        %v1522 = vmax.f32 %v1490, 0.0
        %v1523 = vmax.f32 %v1491, 0.0
        %v1524 = vmax.f32 %v1492, 0.0
        %v1525 = vmax.f32 %v1493, 0.0
        %v1526 = vmax.f32 %v1494, 0.0
        %v1527 = vmax.f32 %v1495, 0.0
        %v1528 = vmax.f32 %v1496, 0.0
        %v1529 = vmax.f32 %v1497, 0.0
        %v1530 = vmax.f32 %v1498, 0.0
        %v1531 = vmax.f32 %v1499, 0.0
        %v1532 = vmax.f32 %v1500, 0.0
        %v1533 = vmax.f32 %v1501, 0.0
        %v1534 = vmax.f32 %v1502, 0.0
        %v1535 = vmax.f32 %v1503, 0.0
        %v1536 = vmax.f32 %v1504, 0.0
        %v1537 = vmax.f32 %v1505, 0.0
        %v1538 = vmax.f32 %v1506, 0.0
        %v1539 = vmax.f32 %v1507, 0.0
        %v1540 = vmax.f32 %v1508, 0.0
        %v1541 = vmax.f32 %v1509, 0.0
        %v1542 = vmax.f32 %v1510, 0.0
        %v1543 = vmax.f32 %v1511, 0.0
        %1544 = vst [vmem:[%s201] sm:$0xff] %v1512
        %1545 = vst [vmem:[%s201 + $0x8] sm:$0xff] %v1513
        %1546 = vst [vmem:[%s201 + $0x10] sm:$0xff] %v1514
        %1547 = vst [vmem:[%s201 + $0x18] sm:$0xff] %v1515
        %1548 = vst [vmem:[%s201 + $0x20] sm:$0xff] %v1516
        %1549 = vst [vmem:[%s201 + $0x28] sm:$0xff] %v1517
        %1550 = vst [vmem:[%s201 + $0x30] sm:$0xff] %v1518
        %1551 = vst [vmem:[%s201 + $0x38] sm:$0xff] %v1519
        %1552 = vst [vmem:[%s201 + $0x40] sm:$0xff] %v1520
        %1553 = vst [vmem:[%s201 + $0x48] sm:$0xff] %v1521
        %1554 = vst [vmem:[%s201 + $0x50] sm:$0xff] %v1522
        %1555 = vst [vmem:[%s201 + $0x58] sm:$0xff] %v1523
        %1556 = vst [vmem:[%s201 + $0x60] sm:$0xff] %v1524
        %1557 = vst [vmem:[%s201 + $0x68] sm:$0xff] %v1525
        %1558 = vst [vmem:[%s201 + $0x70] sm:$0xff] %v1526
        %1559 = vst [vmem:[%s201 + $0x78] sm:$0xff] %v1527
        %1560 = vst [vmem:[%s201 + $0x80] sm:$0xff] %v1528
        %1561 = vst [vmem:[%s201 + $0x88] sm:$0xff] %v1529
        %1562 = vst [vmem:[%s201 + $0x90] sm:$0xff] %v1530
        %1563 = vst [vmem:[%s201 + $0x98] sm:$0xff] %v1531
        %1564 = vst [vmem:[%s201 + $0xa0] sm:$0xff] %v1532
        %1565 = vst [vmem:[%s201 + $0xa8] sm:$0xff] %v1533
        %1566 = vst [vmem:[%s201 + $0xb0] sm:$0xff] %v1534
        %1567 = vst [vmem:[%s201 + $0xb8] sm:$0xff] %v1535
        %1568 = vst [vmem:[%s201 + $0xc0] sm:$0xff] %v1536
        %1569 = vst [vmem:[%s201 + $0xc8] sm:$0xff] %v1537
        %1570 = vst [vmem:[%s201 + $0xd0] sm:$0xff] %v1538
        %1571 = vst [vmem:[%s201 + $0xd8] sm:$0xff] %v1539
        %1572 = vst [vmem:[%s201 + $0xe0] sm:$0xff] %v1540
        %1573 = vst [vmem:[%s201 + $0xe8] sm:$0xff] %v1541
        %1574 = vst [vmem:[%s201 + $0xf0] sm:$0xff] %v1542
        %1575 = vst [vmem:[%s201 + $0xf8] sm:$0xff] %v1543
        %s1576 = sand.u32 %s117, 1
        %s1577 = scalar_lea.sflag [#allocation4], %s1576
        %s1578 = sand.u32 %s117, 1
        %s1579 = smul.addr %s1578, 256
        %s1580 = scalar_lea.vmem [#allocation3], %s1579
        // Predicated region
        $region33: #{tpu_custom_call.1} parent=31 // pred_check
          %p1581 = pneg %p127
        $region34: #{tpu_custom_call.1} parent=31 // pred_check_branch
          %1583 = sbr.rel (%p1581) target = $region36
        $region35: #{tpu_custom_call.1} parent=31 // pred_region
          %s1585 = ssub.s32 4096, 4096
          %1586 = vsyncadd %s1577, %s1585
          %s1587 = smul.addr %s21, 32
          %s1588 = sadd.s32 %s22, %s1587
          %s1589 = smul.addr %s1588, 128
          %s1590 = scalar_lea.hbm %s3, %s1589
          %s1591 = sshll.u32 %s1580, 4
          %s1592 = int_to_ptr.vmem [resolvable:$true] %s1591
          %1597 = dma.vmem_to_hbm [thread:$0]  %s1592, 4096, %s1590, %s1577, 128, 128, 8
        $region36: #{tpu_custom_call.1} parent=31 // pred_fallthru
          _
      $region32: #{tpu_custom_call.1} parent=5 // pred_fallthru
        _
      %p1598 = scmp.le.s32.totalorder 2, %s12
      // Predicated region
      $region37: #{tpu_custom_call.1} parent=5 // pred_check
        %p1599 = pneg %p1598
      $region38: #{tpu_custom_call.1} parent=5 // pred_check_branch
        %1601 = sbr.rel (%p1599) target = $region40
      $region39: #{tpu_custom_call.1} parent=5 // pred_region
        %s1602 = ssub.s32 %s12, 2
        // Predicated region
        $region41: #{tpu_custom_call.1} parent=39 // pred_check
          %p1603 = pneg %p133
        $region42: #{tpu_custom_call.1} parent=39 // pred_check_branch
          %1605 = sbr.rel (%p1603) target = $region44
        $region43: #{tpu_custom_call.1} parent=39 // pred_region
          %s1606 = sand.u32 %s118, 1
          %s1607 = scalar_lea.sflag [#allocation4], %s1606
          %s1608 = sand.u32 %s118, 1
          %s1609 = smul.addr %s1608, 256
          %s1610 = scalar_lea.vmem [#allocation3], %s1609
          %1611 = dma.done %s1607, 4096
        $region44: #{tpu_custom_call.1} parent=39 // pred_fallthru
          _
      $region40: #{tpu_custom_call.1} parent=5 // pred_fallthru
        _
    $region6: #{tpu_custom_call.1} parent=1 // loop_footer
      %s16 = sadd.s32 1, %s12
    $region7: #{tpu_custom_call.1} parent=1 // loop_footer_branch
      %11 = sbr.rel target = $region3
    $region8: #{tpu_custom_call.1} parent=1 // loop_exit
      _
    %1612 = vsyncpa [#allocation4], 1
    %s1613 = scalar_lea.sflag [#allocation4], 1
    %1614 = vsyncpa %s1613, 1

</llo_original>
